<compile_context>
chip_gen: v7x
topology: tpu7x:2x2x1
jax: 0.10.0
libtpu: 0.0.40
codegen_flags: <defaults>
</compile_context>

<pallas_src>
import math
import functools

import numpy as np
import jax
import jax.numpy as jnp
from jax import lax
from jax.experimental import pallas as pl
from jax.experimental.pallas import tpu as pltpu


# ------------------------- positional encoding (host-side glue) -------------------------
def positional_encoding(position, d_model):
    pos = np.arange(position)[:, np.newaxis].astype(np.float32)
    i = np.arange(d_model)[np.newaxis, :].astype(np.float32)
    angle_rates = 1.0 / np.power(10000.0, (2.0 * (i // 2)) / np.float32(d_model))
    angle_rads = pos * angle_rates
    angle_rads[:, 0::2] = np.sin(angle_rads[:, 0::2])
    angle_rads[:, 1::2] = np.cos(angle_rads[:, 1::2])
    return jnp.asarray(angle_rads[np.newaxis, ...], dtype=jnp.float32)  # (1, P, D)


# ----------------------------------- kernel helpers -------------------------------------
def _layer_norm_f32(y, gamma, beta, eps=1e-6):
    mu = jnp.mean(y, axis=-1, keepdims=True)
    d = y - mu
    var = jnp.mean(d * d, axis=-1, keepdims=True)
    return d * lax.rsqrt(var + eps) * gamma + beta


# -------------------------------- fused encoder-stack kernel ----------------------------
def encoder_stack_kernel(x_ref, nmask_ref, sel_ref, wpk_ref, fpk_ref, out_ref,
                         *, num_heads, depth, dff):
    D = num_heads * depth
    H = num_heads
    M = x_ref.shape[0]
    layer = pl.program_id(0)

    # Layer 0: seed the resident carry (out_ref keeps the activation in VMEM across layers).
    @pl.when(layer == 0)
    def _():
        out_ref[...] = x_ref[...]

    x = out_ref[...]                       # (M, D) f32 — previous layer's output
    neg_mask = nmask_ref[...]              # (M, M) f32 additive mask (already * -1e9, block-diag)

    # ---- packed per-layer bf16 weights: one DMA, static tile-aligned row slices ----
    # rows: [0:D) wq | [D:2D) wk*1/sqrt(dk) | [2D:3D) wo | [3D:4D) w1 | [4D:4D+dff) w2
    r = 0
    wq = wpk_ref[0, r:r + D, 0:D];   r += D
    wk = wpk_ref[0, r:r + D, 0:D];   r += D
    wo = wpk_ref[0, r:r + D, 0:D];   r += D
    w1 = wpk_ref[0, r:r + D, 0:dff]; r += D
    w2 = wpk_ref[0, r:r + dff, 0:D]

    # ---- packed per-layer f32 row params: one DMA ----
    bq   = fpk_ref[0, 0:1, 0:D]
    bk   = fpk_ref[0, 1:2, 0:D]            # already scaled by 1/sqrt(dk)
    bo   = fpk_ref[0, 2:3, 0:D]
    b1   = fpk_ref[0, 3:4, 0:dff]
    b2   = fpk_ref[0, 4:5, 0:D]
    ln1g = fpk_ref[0, 5:6, 0:D]
    ln1b = fpk_ref[0, 6:7, 0:D]
    ln2g = fpk_ref[0, 7:8, 0:D]
    ln2b = fpk_ref[0, 8:9, 0:D]

    sel = sel_ref[...]                     # (H, D, depth) bf16 0/1 head selector (resident)

    xb = x.astype(jnp.bfloat16)

    # ---- Q / K projections (separate 2-D dots; scale folded into wk/bk on the host) ----
    q = jnp.dot(xb, wq, preferred_element_type=jnp.float32) + bq    # (M, D); also the value (v = wq(v))
    k = jnp.dot(xb, wk, preferred_element_type=jnp.float32) + bk    # (M, D)
    qb = q.astype(jnp.bfloat16)
    kb = k.astype(jnp.bfloat16)

    # ---- head split via exact 0/1 selector matmul (MXU) -> (H, M, depth), no lane extracts ----
    qh = jnp.einsum('hmk,hkd->hmd', jnp.broadcast_to(qb, (H, M, D)), sel,
                    preferred_element_type=jnp.float32)
    kh = jnp.einsum('hmk,hkd->hmd', jnp.broadcast_to(kb, (H, M, D)), sel,
                    preferred_element_type=jnp.float32)
    qhb = qh.astype(jnp.bfloat16)
    khb = kh.astype(jnp.bfloat16)

    # ---- head-batched attention (batch folded into the M rows; block-diag mask) ----
    s = jnp.einsum('hqd,hkd->hqk', qhb, khb,
                   preferred_element_type=jnp.float32)              # (H, M, M) f32
    s = s + neg_mask                                                # broadcast over heads
    m = jnp.max(s, axis=-1, keepdims=True)
    e = jnp.exp(s - m)
    p = e / jnp.sum(e, axis=-1, keepdims=True)                      # exact softmax (f32)
    # value == q for this (buggy) module; cross-batch weights underflow to exactly 0.
    oh = jnp.einsum('hqk,hkd->hqd', p.astype(jnp.bfloat16), qhb,
                    preferred_element_type=jnp.float32)             # (H, M, depth) f32

    # ---- head merge back to (M, D) via the same selector (head h fills its own columns) ----
    merged = jnp.einsum('hmd,hed->hme', oh.astype(jnp.bfloat16), sel,
                        preferred_element_type=jnp.float32)         # (H, M, D)
    concat = merged[0]
    for h in range(1, H):                                           # pure vector adds
        concat = concat + merged[h]

    attn = jnp.dot(concat.astype(jnp.bfloat16), wo,
                   preferred_element_type=jnp.float32) + bo

    # ---- residual + LayerNorm 1 (f32) ----
    out1 = _layer_norm_f32(x + attn, ln1g, ln1b)

    # ---- feed-forward: Linear(D->dff) -> ReLU -> Linear(dff->D) ----
    h1 = jnp.dot(out1.astype(jnp.bfloat16), w1,
                 preferred_element_type=jnp.float32) + b1
    h1 = jnp.maximum(h1, 0.0)
    ffn = jnp.dot(h1.astype(jnp.bfloat16), w2,
                  preferred_element_type=jnp.float32) + b2

    # ---- residual + LayerNorm 2 (f32) ----
    out_ref[...] = _layer_norm_f32(out1 + ffn, ln2g, ln2b).astype(out_ref.dtype)


def encoder_stack_pallas(x2, neg_mask, wpk, fpk, sel, num_heads, dff):
    """x2: (B*S, D) f32, neg_mask: (B*S, B*S) f32, wpk/fpk: packed per-layer params, sel: selector."""
    L, WR, WC = wpk.shape
    _, FR, FC = fpk.shape
    M, D = x2.shape
    depth = D // num_heads

    kernel = functools.partial(encoder_stack_kernel,
                               num_heads=num_heads, depth=depth, dff=dff)

    return pl.pallas_call(
        kernel,
        out_shape=jax.ShapeDtypeStruct((M, D), jnp.float32),
        grid_spec=pltpu.PrefetchScalarGridSpec(
            num_scalar_prefetch=0,
            grid=(L,),                                              # layer axis (sequential carry)
            in_specs=[
                pl.BlockSpec((M, D), lambda l: (0, 0)),             # x (layer-0 input, resident)
                pl.BlockSpec((M, M), lambda l: (0, 0)),             # additive mask (resident)
                pl.BlockSpec(sel.shape, lambda l: (0, 0, 0)),       # head selector (resident)
                pl.BlockSpec((1, WR, WC), lambda l: (l, 0, 0)),     # packed bf16 weights (prefetched)
                pl.BlockSpec((1, FR, FC), lambda l: (l, 0, 0)),     # packed f32 biases/LN params
            ],
            # Same output block for every layer -> resident VMEM carry across the layer axis.
            out_specs=pl.BlockSpec((M, D), lambda l: (0, 0)),
        ),
        compiler_params=pltpu.CompilerParams(
            dimension_semantics=("arbitrary",),
            vmem_limit_bytes=32 * 1024 * 1024,
        ),
    )(x2, neg_mask, sel, wpk, fpk)


# --------------------------------- wrapper-side glue ------------------------------------
def build_additive_mask(mask, B, S):
    """mask: (B, 1, S, S) float (1 = masked) -> (B*S, B*S) additive mask: within-batch blocks
    carry mask * -1e9, cross-batch blocks are -1e9 (block-diagonal attention over folded batch)."""
    user = mask[:, 0, :, :].astype(jnp.float32) * (-1e9)              # (B, S, S)
    same = jnp.eye(B, dtype=jnp.float32)[:, None, :, None]            # (B, 1, B, 1)
    add = same * user[:, :, None, :] + (1.0 - same) * (-1e9)          # (B, S, B, S)
    return add.reshape(B * S, B * S)


def init_encoder_params(key, num_layers, d_model, num_heads, dff, vocab_size):
    """Deterministic parameter init. Linear weights stored as (in, out) = W^T."""
    params = {}
    key, k_emb = jax.random.split(key)
    params["embedding"] = jax.random.normal(k_emb, (vocab_size, d_model), jnp.float32) * 0.02

    layers = []
    for _ in range(num_layers):
        lp = {}

        def lin(key, fan_in, fan_out):
            kw, kb, key = jax.random.split(key, 3)
            bound = 1.0 / math.sqrt(fan_in)
            w = jax.random.uniform(kw, (fan_in, fan_out), jnp.float32, -bound, bound)
            b = jax.random.uniform(kb, (1, fan_out), jnp.float32, -bound, bound)
            return key, w, b

        key, lp["wq"], lp["bq"] = lin(key, d_model, d_model)
        key, lp["wk"], lp["bk"] = lin(key, d_model, d_model)
        key, _wv, _bv = lin(key, d_model, d_model)  # wv exists in the module but is unused (v = wq(v))
        key, lp["wo"], lp["bo"] = lin(key, d_model, d_model)
        key, lp["w1"], lp["b1"] = lin(key, d_model, dff)
        key, lp["w2"], lp["b2"] = lin(key, dff, d_model)
        lp["ln1_g"] = jnp.ones((1, d_model), jnp.float32)
        lp["ln1_b"] = jnp.zeros((1, d_model), jnp.float32)
        lp["ln2_g"] = jnp.ones((1, d_model), jnp.float32)
        lp["ln2_b"] = jnp.zeros((1, d_model), jnp.float32)
        layers.append(lp)
    params["layers"] = layers
    return params


def pack_layer_params(layers, num_heads):
    """Pack all per-layer params into two stacked buffers (bf16 weights / f32 row params) and
    build the 0/1 head-split selector.  The 1/sqrt(d_k) scale is folded into the K projection
    (NOT Q, because v = wq(v) would otherwise also get scaled)."""
    L = len(layers)
    D = int(layers[0]["wq"].shape[0])
    dff = int(layers[0]["w1"].shape[1])
    depth = D // num_heads
    scale = 1.0 / math.sqrt(depth)

    wcols = max(D, dff)
    wrows = 4 * D + dff
    wrows = ((wrows + 15) // 16) * 16      # bf16 sublane-tile alignment
    frows = 16                             # 9 used rows, padded to a multiple of 8

    wpk = np.zeros((L, wrows, wcols), np.float32)
    fpk = np.zeros((L, frows, wcols), np.float32)
    for li, lp in enumerate(layers):
        r = 0
        wpk[li, r:r + D, :D] = np.asarray(lp["wq"]);           r += D
        wpk[li, r:r + D, :D] = np.asarray(lp["wk"]) * scale;   r += D
        wpk[li, r:r + D, :D] = np.asarray(lp["wo"]);           r += D
        wpk[li, r:r + D, :dff] = np.asarray(lp["w1"]);         r += D
        wpk[li, r:r + dff, :D] = np.asarray(lp["w2"])
        fpk[li, 0, :D] = np.asarray(lp["bq"]).reshape(-1)
        fpk[li, 1, :D] = np.asarray(lp["bk"]).reshape(-1) * scale
        fpk[li, 2, :D] = np.asarray(lp["bo"]).reshape(-1)
        fpk[li, 3, :dff] = np.asarray(lp["b1"]).reshape(-1)
        fpk[li, 4, :D] = np.asarray(lp["b2"]).reshape(-1)
        fpk[li, 5, :D] = np.asarray(lp["ln1_g"]).reshape(-1)
        fpk[li, 6, :D] = np.asarray(lp["ln1_b"]).reshape(-1)
        fpk[li, 7, :D] = np.asarray(lp["ln2_g"]).reshape(-1)
        fpk[li, 8, :D] = np.asarray(lp["ln2_b"]).reshape(-1)

    sel = np.zeros((num_heads, D, depth), np.float32)          # exact 0/1 head split/merge selector
    for h in range(num_heads):
        sel[h, h * depth:(h + 1) * depth, :] = np.eye(depth, dtype=np.float32)

    return (jnp.asarray(wpk, jnp.bfloat16),
            jnp.asarray(fpk, jnp.float32),
            jnp.asarray(sel, jnp.bfloat16))


def encoder_forward(tokens, mask, params, pos_encoding, d_model, num_heads, dff):
    """tokens: (B, S) int32, mask: (B, 1, S, S) f32 -> (B, S, D) f32."""
    B, S = tokens.shape
    # Embedding lookup + scale + positional encoding (plain-JAX glue; dropout == identity).
    x = jnp.take(params["embedding"], tokens, axis=0)                 # (B, S, D)
    x = x * jnp.sqrt(jnp.float32(d_model))
    x = x + pos_encoding[:, :S, :]
    x2 = x.reshape(B * S, d_model).astype(jnp.float32)                # batch folded into M
    neg_mask = build_additive_mask(mask, B, S)
    wpk, fpk, sel = pack_layer_params(params["layers"], num_heads)
    out = encoder_stack_pallas(x2, neg_mask, wpk, fpk, sel, num_heads, dff)
    return out.reshape(B, S, d_model)


# ------------------------------------------ main ----------------------------------------
if __name__ == "__main__":
    num_layers = 2
    d_model = 32
    num_heads = 4
    dff = 64
    vocab_size = 50
    max_pos = 16

    B, S = 2, 8

    key = jax.random.PRNGKey(0)
    key, k_tok = jax.random.split(key)
    tokens = jax.random.randint(k_tok, (B, S), 0, vocab_size, dtype=jnp.int32)
    mask = jnp.zeros((B, 1, S, S), jnp.float32)   # no padding mask (broadcast over heads)

    params = init_encoder_params(key, num_layers, d_model, num_heads, dff, vocab_size)
    pos_enc = positional_encoding(max_pos, d_model)

    out = encoder_forward(tokens, mask, params, pos_enc, d_model, num_heads, dff)
    out = jax.block_until_ready(out)
    assert out.shape == (B, S, d_model), out.shape
    assert bool(jnp.all(jnp.isfinite(out)))
    print("KERNEL_OK")
</pallas_src>

<mosaic_0001>
module attributes {stable_mosaic.version = 11 : i64} {
  func.func @encoder_stack_kernel(%arg0: i32, %arg1: memref<16x32xf32, #tpu.memory_space<vmem>>, %arg2: memref<16x16xf32, #tpu.memory_space<vmem>>, %arg3: memref<4x32x8xbf16, #tpu.memory_space<vmem>>, %arg4: memref<1x192x64xbf16, #tpu.memory_space<vmem>>, %arg5: memref<1x16x64xf32, #tpu.memory_space<vmem>>, %arg6: memref<16x32xf32, #tpu.memory_space<vmem>>) attributes {dimension_semantics = [#tpu.dimension_semantics<arbitrary>], iteration_bounds = array<i64: 2>, scalar_prefetch = 0 : i64, scratch_operands = 0 : i64, tpu.core_type = #tpu.core_type<tc>, window_params = [{pipeline_mode = #tpu.pipeline_mode<synchronous>, transform_indices = @transform_0, window_bounds = array<i64: 16, 32>}, {pipeline_mode = #tpu.pipeline_mode<synchronous>, transform_indices = @transform_1, window_bounds = array<i64: 16, 16>}, {pipeline_mode = #tpu.pipeline_mode<synchronous>, transform_indices = @transform_2, window_bounds = array<i64: 4, 32, 8>}, {transform_indices = @transform_3, window_bounds = array<i64: 1, 192, 64>}, {transform_indices = @transform_4, window_bounds = array<i64: 1, 16, 64>}, {pipeline_mode = #tpu.pipeline_mode<synchronous>, transform_indices = @transform_5, window_bounds = array<i64: 16, 32>}]} {
    %c0_i32 = arith.constant 0 : i32
    %0 = arith.cmpi eq, %arg0, %c0_i32 : i32
    %1 = arith.extui %0 : i1 to i32
    %c0_i32_0 = arith.constant 0 : i32
    %2 = arith.cmpi ne, %1, %c0_i32_0 : i32
    scf.if %2 {
      %c0_61 = arith.constant 0 : index
      %c0_62 = arith.constant 0 : index
      %136 = vector.load %arg1[%c0_61, %c0_62] : memref<16x32xf32, #tpu.memory_space<vmem>>, vector<16x32xf32>
      %c0_63 = arith.constant 0 : index
      %c0_64 = arith.constant 0 : index
      %137 = vector.load %arg6[%c0_63, %c0_64] : memref<16x32xf32, #tpu.memory_space<vmem>>, vector<16x32xf32>
      tpu.vector_store %arg6[%c0_63, %c0_64], %136 {strides = array<i32>} : memref<16x32xf32, #tpu.memory_space<vmem>>, vector<16x32xf32>,
    } else {
    }
    %c0 = arith.constant 0 : index
    %c0_1 = arith.constant 0 : index
    %3 = vector.load %arg6[%c0, %c0_1] : memref<16x32xf32, #tpu.memory_space<vmem>>, vector<16x32xf32>
    %c0_2 = arith.constant 0 : index
    %c0_3 = arith.constant 0 : index
    %4 = vector.load %arg2[%c0_2, %c0_3] : memref<16x16xf32, #tpu.memory_space<vmem>>, vector<16x16xf32>
    %c0_4 = arith.constant 0 : index
    %c0_5 = arith.constant 0 : index
    %c0_6 = arith.constant 0 : index
    %5 = vector.load %arg4[%c0_4, %c0_5, %c0_6] : memref<1x192x64xbf16, #tpu.memory_space<vmem>>, vector<1x32x32xbf16>
    %6 = vector.shape_cast %5 : vector<1x32x32xbf16> to vector<32x32xbf16>
    %c0_7 = arith.constant 0 : index
    %c32 = arith.constant 32 : index
    %c0_8 = arith.constant 0 : index
    %7 = vector.load %arg4[%c0_7, %c32, %c0_8] : memref<1x192x64xbf16, #tpu.memory_space<vmem>>, vector<1x32x32xbf16>
    %8 = vector.shape_cast %7 : vector<1x32x32xbf16> to vector<32x32xbf16>
    %c0_9 = arith.constant 0 : index
    %c64 = arith.constant 64 : index
    %c0_10 = arith.constant 0 : index
    %9 = vector.load %arg4[%c0_9, %c64, %c0_10] : memref<1x192x64xbf16, #tpu.memory_space<vmem>>, vector<1x32x32xbf16>
    %10 = vector.shape_cast %9 : vector<1x32x32xbf16> to vector<32x32xbf16>
    %c0_11 = arith.constant 0 : index
    %c96 = arith.constant 96 : index
    %c0_12 = arith.constant 0 : index
    %11 = vector.load %arg4[%c0_11, %c96, %c0_12] : memref<1x192x64xbf16, #tpu.memory_space<vmem>>, vector<1x32x64xbf16>
    %12 = vector.shape_cast %11 : vector<1x32x64xbf16> to vector<32x64xbf16>
    %c0_13 = arith.constant 0 : index
    %c128 = arith.constant 128 : index
    %c0_14 = arith.constant 0 : index
    %13 = vector.load %arg4[%c0_13, %c128, %c0_14] : memref<1x192x64xbf16, #tpu.memory_space<vmem>>, vector<1x64x32xbf16>
    %14 = vector.shape_cast %13 : vector<1x64x32xbf16> to vector<64x32xbf16>
    %c0_15 = arith.constant 0 : index
    %c0_16 = arith.constant 0 : index
    %c0_17 = arith.constant 0 : index
    %15 = vector.load %arg5[%c0_15, %c0_16, %c0_17] : memref<1x16x64xf32, #tpu.memory_space<vmem>>, vector<1x1x32xf32>
    %16 = vector.shape_cast %15 : vector<1x1x32xf32> to vector<1x32xf32>
    %c0_18 = arith.constant 0 : index
    %c1 = arith.constant 1 : index
    %c0_19 = arith.constant 0 : index
    %17 = vector.load %arg5[%c0_18, %c1, %c0_19] : memref<1x16x64xf32, #tpu.memory_space<vmem>>, vector<1x1x32xf32>
    %18 = vector.shape_cast %17 : vector<1x1x32xf32> to vector<1x32xf32>
    %c0_20 = arith.constant 0 : index
    %c2 = arith.constant 2 : index
    %c0_21 = arith.constant 0 : index
    %19 = vector.load %arg5[%c0_20, %c2, %c0_21] : memref<1x16x64xf32, #tpu.memory_space<vmem>>, vector<1x1x32xf32>
    %20 = vector.shape_cast %19 : vector<1x1x32xf32> to vector<1x32xf32>
    %c0_22 = arith.constant 0 : index
    %c3 = arith.constant 3 : index
    %c0_23 = arith.constant 0 : index
    %21 = vector.load %arg5[%c0_22, %c3, %c0_23] : memref<1x16x64xf32, #tpu.memory_space<vmem>>, vector<1x1x64xf32>
    %22 = vector.shape_cast %21 : vector<1x1x64xf32> to vector<1x64xf32>
    %c0_24 = arith.constant 0 : index
    %c4 = arith.constant 4 : index
    %c0_25 = arith.constant 0 : index
    %23 = vector.load %arg5[%c0_24, %c4, %c0_25] : memref<1x16x64xf32, #tpu.memory_space<vmem>>, vector<1x1x32xf32>
    %24 = vector.shape_cast %23 : vector<1x1x32xf32> to vector<1x32xf32>
    %c0_26 = arith.constant 0 : index
    %c5 = arith.constant 5 : index
    %c0_27 = arith.constant 0 : index
    %25 = vector.load %arg5[%c0_26, %c5, %c0_27] : memref<1x16x64xf32, #tpu.memory_space<vmem>>, vector<1x1x32xf32>
    %26 = vector.shape_cast %25 : vector<1x1x32xf32> to vector<1x32xf32>
    %c0_28 = arith.constant 0 : index
    %c6 = arith.constant 6 : index
    %c0_29 = arith.constant 0 : index
    %27 = vector.load %arg5[%c0_28, %c6, %c0_29] : memref<1x16x64xf32, #tpu.memory_space<vmem>>, vector<1x1x32xf32>
    %28 = vector.shape_cast %27 : vector<1x1x32xf32> to vector<1x32xf32>
    %c0_30 = arith.constant 0 : index
    %c7 = arith.constant 7 : index
    %c0_31 = arith.constant 0 : index
    %29 = vector.load %arg5[%c0_30, %c7, %c0_31] : memref<1x16x64xf32, #tpu.memory_space<vmem>>, vector<1x1x32xf32>
    %30 = vector.shape_cast %29 : vector<1x1x32xf32> to vector<1x32xf32>
    %c0_32 = arith.constant 0 : index
    %c8 = arith.constant 8 : index
    %c0_33 = arith.constant 0 : index
    %31 = vector.load %arg5[%c0_32, %c8, %c0_33] : memref<1x16x64xf32, #tpu.memory_space<vmem>>, vector<1x1x32xf32>
    %32 = vector.shape_cast %31 : vector<1x1x32xf32> to vector<1x32xf32>
    %c0_34 = arith.constant 0 : index
    %c0_35 = arith.constant 0 : index
    %c0_36 = arith.constant 0 : index
    %33 = vector.load %arg3[%c0_34, %c0_35, %c0_36] : memref<4x32x8xbf16, #tpu.memory_space<vmem>>, vector<4x32x8xbf16>
    %34 = arith.truncf %3 : vector<16x32xf32> to vector<16x32xbf16>
    %cst = arith.constant dense<0.000000e+00> : vector<16x32xf32>
    %35 = tpu.matmul %34, %6, %cst {dimension_numbers = #tpu.dot_dimension_numbers<[1], [0], [0], [1], [0, 0, 1, 1], [], []>} : vector<16x32xbf16>, vector<32x32xbf16>, vector<16x32xf32> -> vector<16x32xf32>
    %36 = vector.broadcast %16 : vector<1x32xf32> to vector<16x32xf32>
    %37 = arith.addf %35, %36 : vector<16x32xf32>
    %cst_37 = arith.constant dense<0.000000e+00> : vector<16x32xf32>
    %38 = tpu.matmul %34, %8, %cst_37 {dimension_numbers = #tpu.dot_dimension_numbers<[1], [0], [0], [1], [0, 0, 1, 1], [], []>} : vector<16x32xbf16>, vector<32x32xbf16>, vector<16x32xf32> -> vector<16x32xf32>
    %39 = vector.broadcast %18 : vector<1x32xf32> to vector<16x32xf32>
    %40 = arith.addf %38, %39 : vector<16x32xf32>
    %41 = arith.truncf %37 : vector<16x32xf32> to vector<16x32xbf16>
    %42 = arith.truncf %40 : vector<16x32xf32> to vector<16x32xbf16>
    %43 = vector.shape_cast %41 : vector<16x32xbf16> to vector<1x16x32xbf16>
    %44 = vector.broadcast %43 : vector<1x16x32xbf16> to vector<4x16x32xbf16>
    "tpu.trace_start"() <{level = 10 : i32, message = "hmk,hkd->hmd"}> : () -> ()
    %cst_38 = arith.constant dense<0.000000e+00> : vector<4x16x8xf32>
    %45 = tpu.matmul %44, %33, %cst_38 {dimension_numbers = #tpu.dot_dimension_numbers<[2], [1], [1], [2], [0, 0, 0, 1, 1, 2], [0], [0]>} : vector<4x16x32xbf16>, vector<4x32x8xbf16>, vector<4x16x8xf32> -> vector<4x16x8xf32>
    "tpu.trace_stop"() : () -> ()
    %46 = vector.shape_cast %42 : vector<16x32xbf16> to vector<1x16x32xbf16>
    %47 = vector.broadcast %46 : vector<1x16x32xbf16> to vector<4x16x32xbf16>
    "tpu.trace_start"() <{level = 10 : i32, message = "hmk,hkd->hmd"}> : () -> ()
    %cst_39 = arith.constant dense<0.000000e+00> : vector<4x16x8xf32>
    %48 = tpu.matmul %47, %33, %cst_39 {dimension_numbers = #tpu.dot_dimension_numbers<[2], [1], [1], [2], [0, 0, 0, 1, 1, 2], [0], [0]>} : vector<4x16x32xbf16>, vector<4x32x8xbf16>, vector<4x16x8xf32> -> vector<4x16x8xf32>
    "tpu.trace_stop"() : () -> ()
    %49 = arith.truncf %45 : vector<4x16x8xf32> to vector<4x16x8xbf16>
    %50 = arith.truncf %48 : vector<4x16x8xf32> to vector<4x16x8xbf16>
    "tpu.trace_start"() <{level = 10 : i32, message = "hqd,hkd->hqk"}> : () -> ()
    %cst_40 = arith.constant dense<0.000000e+00> : vector<4x16x16xf32>
    %51 = tpu.matmul %49, %50, %cst_40 {dimension_numbers = #tpu.dot_dimension_numbers<[2], [2], [1], [1], [0, 0, 0, 1, 1, 1], [0], [0]>} : vector<4x16x8xbf16>, vector<4x16x8xbf16>, vector<4x16x16xf32> -> vector<4x16x16xf32>
    "tpu.trace_stop"() : () -> ()
    %52 = vector.shape_cast %4 : vector<16x16xf32> to vector<1x16x16xf32>
    %53 = vector.broadcast %52 : vector<1x16x16xf32> to vector<4x16x16xf32>
    %54 = arith.addf %51, %53 : vector<4x16x16xf32>
    %cst_41 = arith.constant dense<0xFF800000> : vector<4x16xf32>
    %55 = vector.multi_reduction <maximumf>, %54, %cst_41 [2] : vector<4x16x16xf32> to vector<4x16xf32>
    %56 = vector.shape_cast %55 : vector<4x16xf32> to vector<4x16x1xf32>
    %57 = vector.broadcast %56 : vector<4x16x1xf32> to vector<4x16x16xf32>
    %58 = arith.subf %54, %57 : vector<4x16x16xf32>
    %59 = math.exp %58 : vector<4x16x16xf32>
    %cst_42 = arith.constant dense<0.000000e+00> : vector<4x16xf32>
    %60 = vector.multi_reduction <add>, %59, %cst_42 [2] : vector<4x16x16xf32> to vector<4x16xf32>
    %61 = vector.shape_cast %60 : vector<4x16xf32> to vector<4x16x1xf32>
    %62 = vector.broadcast %61 : vector<4x16x1xf32> to vector<4x16x16xf32>
    %63 = arith.divf %59, %62 : vector<4x16x16xf32>
    %64 = arith.truncf %63 : vector<4x16x16xf32> to vector<4x16x16xbf16>
    "tpu.trace_start"() <{level = 10 : i32, message = "hqk,hkd->hqd"}> : () -> ()
    %cst_43 = arith.constant dense<0.000000e+00> : vector<4x16x8xf32>
    %65 = tpu.matmul %64, %49, %cst_43 {dimension_numbers = #tpu.dot_dimension_numbers<[2], [1], [1], [2], [0, 0, 0, 1, 1, 2], [0], [0]>} : vector<4x16x16xbf16>, vector<4x16x8xbf16>, vector<4x16x8xf32> -> vector<4x16x8xf32>
    "tpu.trace_stop"() : () -> ()
    %66 = arith.truncf %65 : vector<4x16x8xf32> to vector<4x16x8xbf16>
    "tpu.trace_start"() <{level = 10 : i32, message = "hmd,hed->hme"}> : () -> ()
    %cst_44 = arith.constant dense<0.000000e+00> : vector<4x16x32xf32>
    %67 = tpu.matmul %66, %33, %cst_44 {dimension_numbers = #tpu.dot_dimension_numbers<[2], [2], [1], [1], [0, 0, 0, 1, 1, 1], [0], [0]>} : vector<4x16x8xbf16>, vector<4x32x8xbf16>, vector<4x16x32xf32> -> vector<4x16x32xf32>
    "tpu.trace_stop"() : () -> ()
    %68 = vector.extract_strided_slice %67 {offsets = [0, 0, 0], sizes = [1, 16, 32], strides = [1, 1, 1]} : vector<4x16x32xf32> to vector<1x16x32xf32>
    %69 = vector.shape_cast %68 : vector<1x16x32xf32> to vector<16x32xf32>
    %70 = vector.extract_strided_slice %67 {offsets = [1, 0, 0], sizes = [1, 16, 32], strides = [1, 1, 1]} : vector<4x16x32xf32> to vector<1x16x32xf32>
    %71 = vector.shape_cast %70 : vector<1x16x32xf32> to vector<16x32xf32>
    %72 = arith.addf %69, %71 : vector<16x32xf32>
    %73 = vector.extract_strided_slice %67 {offsets = [2, 0, 0], sizes = [1, 16, 32], strides = [1, 1, 1]} : vector<4x16x32xf32> to vector<1x16x32xf32>
    %74 = vector.shape_cast %73 : vector<1x16x32xf32> to vector<16x32xf32>
    %75 = arith.addf %72, %74 : vector<16x32xf32>
    %76 = vector.extract_strided_slice %67 {offsets = [3, 0, 0], sizes = [1, 16, 32], strides = [1, 1, 1]} : vector<4x16x32xf32> to vector<1x16x32xf32>
    %77 = vector.shape_cast %76 : vector<1x16x32xf32> to vector<16x32xf32>
    %78 = arith.addf %75, %77 : vector<16x32xf32>
    %79 = arith.truncf %78 : vector<16x32xf32> to vector<16x32xbf16>
    %cst_45 = arith.constant dense<0.000000e+00> : vector<16x32xf32>
    %80 = tpu.matmul %79, %10, %cst_45 {dimension_numbers = #tpu.dot_dimension_numbers<[1], [0], [0], [1], [0, 0, 1, 1], [], []>} : vector<16x32xbf16>, vector<32x32xbf16>, vector<16x32xf32> -> vector<16x32xf32>
    %81 = vector.broadcast %20 : vector<1x32xf32> to vector<16x32xf32>
    %82 = arith.addf %80, %81 : vector<16x32xf32>
    %83 = arith.addf %3, %82 : vector<16x32xf32>
    %cst_46 = arith.constant dense<0.000000e+00> : vector<16xf32>
    %84 = vector.multi_reduction <add>, %83, %cst_46 [1] : vector<16x32xf32> to vector<16xf32>
    %85 = vector.shape_cast %84 : vector<16xf32> to vector<16x1xf32>
    %cst_47 = arith.constant 3.200000e+01 : f32
    %86 = vector.broadcast %cst_47 : f32 to vector<16x1xf32>
    %87 = arith.divf %85, %86 : vector<16x1xf32>
    %88 = vector.broadcast %87 : vector<16x1xf32> to vector<16x32xf32>
    %89 = arith.subf %83, %88 : vector<16x32xf32>
    %90 = arith.mulf %89, %89 : vector<16x32xf32>
    %cst_48 = arith.constant dense<0.000000e+00> : vector<16xf32>
    %91 = vector.multi_reduction <add>, %90, %cst_48 [1] : vector<16x32xf32> to vector<16xf32>
    %92 = vector.shape_cast %91 : vector<16xf32> to vector<16x1xf32>
    %cst_49 = arith.constant 3.200000e+01 : f32
    %93 = vector.broadcast %cst_49 : f32 to vector<16x1xf32>
    %94 = arith.divf %92, %93 : vector<16x1xf32>
    %cst_50 = arith.constant 9.99999997E-7 : f32
    %95 = vector.broadcast %cst_50 : f32 to vector<16x1xf32>
    %96 = arith.addf %94, %95 : vector<16x1xf32>
    %97 = math.rsqrt %96 : vector<16x1xf32>
    %98 = vector.broadcast %97 : vector<16x1xf32> to vector<16x32xf32>
    %99 = arith.mulf %89, %98 : vector<16x32xf32>
    %100 = vector.broadcast %26 : vector<1x32xf32> to vector<16x32xf32>
    %101 = arith.mulf %99, %100 : vector<16x32xf32>
    %102 = vector.broadcast %28 : vector<1x32xf32> to vector<16x32xf32>
    %103 = arith.addf %101, %102 : vector<16x32xf32>
    %104 = arith.truncf %103 : vector<16x32xf32> to vector<16x32xbf16>
    %cst_51 = arith.constant dense<0.000000e+00> : vector<16x64xf32>
    %105 = tpu.matmul %104, %12, %cst_51 {dimension_numbers = #tpu.dot_dimension_numbers<[1], [0], [0], [1], [0, 0, 1, 1], [], []>} : vector<16x32xbf16>, vector<32x64xbf16>, vector<16x64xf32> -> vector<16x64xf32>
    %106 = vector.broadcast %22 : vector<1x64xf32> to vector<16x64xf32>
    %107 = arith.addf %105, %106 : vector<16x64xf32>
    %cst_52 = arith.constant 0.000000e+00 : f32
    %108 = vector.broadcast %cst_52 : f32 to vector<16x64xf32>
    %109 = arith.maximumf %107, %108 : vector<16x64xf32>
    %110 = arith.truncf %109 : vector<16x64xf32> to vector<16x64xbf16>
    %cst_53 = arith.constant dense<0.000000e+00> : vector<16x32xf32>
    %111 = tpu.matmul %110, %14, %cst_53 {dimension_numbers = #tpu.dot_dimension_numbers<[1], [0], [0], [1], [0, 0, 1, 1], [], []>} : vector<16x64xbf16>, vector<64x32xbf16>, vector<16x32xf32> -> vector<16x32xf32>
    %112 = vector.broadcast %24 : vector<1x32xf32> to vector<16x32xf32>
    %113 = arith.addf %111, %112 : vector<16x32xf32>
    %114 = arith.addf %103, %113 : vector<16x32xf32>
    %cst_54 = arith.constant dense<0.000000e+00> : vector<16xf32>
    %115 = vector.multi_reduction <add>, %114, %cst_54 [1] : vector<16x32xf32> to vector<16xf32>
    %116 = vector.shape_cast %115 : vector<16xf32> to vector<16x1xf32>
    %cst_55 = arith.constant 3.200000e+01 : f32
    %117 = vector.broadcast %cst_55 : f32 to vector<16x1xf32>
    %118 = arith.divf %116, %117 : vector<16x1xf32>
    %119 = vector.broadcast %118 : vector<16x1xf32> to vector<16x32xf32>
    %120 = arith.subf %114, %119 : vector<16x32xf32>
    %121 = arith.mulf %120, %120 : vector<16x32xf32>
    %cst_56 = arith.constant dense<0.000000e+00> : vector<16xf32>
    %122 = vector.multi_reduction <add>, %121, %cst_56 [1] : vector<16x32xf32> to vector<16xf32>
    %123 = vector.shape_cast %122 : vector<16xf32> to vector<16x1xf32>
    %cst_57 = arith.constant 3.200000e+01 : f32
    %124 = vector.broadcast %cst_57 : f32 to vector<16x1xf32>
    %125 = arith.divf %123, %124 : vector<16x1xf32>
    %cst_58 = arith.constant 9.99999997E-7 : f32
    %126 = vector.broadcast %cst_58 : f32 to vector<16x1xf32>
    %127 = arith.addf %125, %126 : vector<16x1xf32>
    %128 = math.rsqrt %127 : vector<16x1xf32>
    %129 = vector.broadcast %128 : vector<16x1xf32> to vector<16x32xf32>
    %130 = arith.mulf %120, %129 : vector<16x32xf32>
    %131 = vector.broadcast %30 : vector<1x32xf32> to vector<16x32xf32>
    %132 = arith.mulf %130, %131 : vector<16x32xf32>
    %133 = vector.broadcast %32 : vector<1x32xf32> to vector<16x32xf32>
    %134 = arith.addf %132, %133 : vector<16x32xf32>
    %c0_59 = arith.constant 0 : index
    %c0_60 = arith.constant 0 : index
    %135 = vector.load %arg6[%c0_59, %c0_60] : memref<16x32xf32, #tpu.memory_space<vmem>>, vector<16x32xf32>
    tpu.vector_store %arg6[%c0_59, %c0_60], %134 {strides = array<i32>} : memref<16x32xf32, #tpu.memory_space<vmem>>, vector<16x32xf32>,
    return
  }
  func.func @transform_0(%arg0: i32) -> (i32, i32) {
    %c0_i32 = arith.constant 0 : i32
    %c0_i32_0 = arith.constant 0 : i32
    %c0_i32_1 = arith.constant 0 : i32
    return %c0_i32, %c0_i32_0 : i32, i32
  }
  func.func @transform_1(%arg0: i32) -> (i32, i32) {
    %c0_i32 = arith.constant 0 : i32
    %c0_i32_0 = arith.constant 0 : i32
    %c0_i32_1 = arith.constant 0 : i32
    return %c0_i32, %c0_i32_0 : i32, i32
  }
  func.func @transform_2(%arg0: i32) -> (i32, i32, i32) {
    %c0_i32 = arith.constant 0 : i32
    %c0_i32_0 = arith.constant 0 : i32
    %c0_i32_1 = arith.constant 0 : i32
    %c0_i32_2 = arith.constant 0 : i32
    return %c0_i32, %c0_i32_0, %c0_i32_1 : i32, i32, i32
  }
  func.func @transform_3(%arg0: i32) -> (i32, i32, i32) {
    %c0_i32 = arith.constant 0 : i32
    %c0_i32_0 = arith.constant 0 : i32
    %c0_i32_1 = arith.constant 0 : i32
    return %arg0, %c0_i32, %c0_i32_0 : i32, i32, i32
  }
  func.func @transform_4(%arg0: i32) -> (i32, i32, i32) {
    %c0_i32 = arith.constant 0 : i32
    %c0_i32_0 = arith.constant 0 : i32
    %c0_i32_1 = arith.constant 0 : i32
    return %arg0, %c0_i32, %c0_i32_0 : i32, i32, i32
  }
  func.func @transform_5(%arg0: i32) -> (i32, i32) {
    %c0_i32 = arith.constant 0 : i32
    %c0_i32_0 = arith.constant 0 : i32
    %c0_i32_1 = arith.constant 0 : i32
    return %c0_i32, %c0_i32_0 : i32, i32
  }
}

</mosaic_0001>

<llo_original>
// kernel: tpu_custom_call.1
$region0: #{tpu_custom_call.1}
  #allocation0 [shape = 'u32[]', space=smem, size = 0x4, offset = 0x4, fixed_abs, tag = 'smem constant byte address 0x4 - core index']
  #allocation1 [shape = 'u32[144,128]{1,0:T(1,128)}', space=vmem, size = 0x12000, scoped, tag = 'internal scratch']
  %s0 = inlined_call_operand.vmem [shape: f32[16,32], index: 0, kind: input, shape index: {}]
  %s1 = inlined_call_operand.vmem [shape: f32[16,16], index: 1, kind: input, shape index: {}]
  %s2 = inlined_call_operand.vmem [shape: bf16[4,32,8], index: 2, kind: input, shape index: {}]
  %s3 = inlined_call_operand.vmem [shape: bf16[2,192,64], index: 3, kind: input, shape index: {}]
  %s4 = inlined_call_operand.vmem [shape: f32[2,16,64], index: 4, kind: input, shape index: {}]
  %s5 = inlined_call_operand.hbm [shape: f32[16,32], index: 5, kind: output, shape index: {}]
  %s6 = sld [smem:[#allocation0]]
  $region57: #{tpu_custom_call.1} parent=0
    _
  %s8 = ssub.s32 1, %s6
  %s9 = scalar_select 0, %s8, %s6
  $region1: #{tpu_custom_call.1} parent=0
    #allocation2 [shape = 'u8[8192]{0}', space=vmem, size = 0x2000, scoped, tag = 'output window, operand 0, single buffered']
    #allocation3 [shape = 's32[2]{0}', space=sflag, size = 0x8, scoped, tag = 'scoped memory for tpu_custom_call.1']
    %10 = vsyncpa [#allocation3], 0
    loop: start=0, step=1, limit=4
    $region2: #{tpu_custom_call.1} parent=1 // loop_pre_header
      _
    $region3: #{tpu_custom_call.1} parent=1 // loop_header
      %s12 = sphi 0, %s16
      %p13 = scmp.ge.s32.totalorder %s12, 4
      %s20 = sphi 0, %s20
      %s22 = sphi 0, %s20
      %s23 = sphi 0, %s22
      %s37 = sphi 0, %s23
      %s41 = sphi 0, %s41
      %s43 = sphi 0, %s41
      %s44 = sphi 0, %s43
      %s58 = sphi 0, %s44
      %s62 = sphi 0, %s62
      %s64 = sphi 0, %s62
      %s65 = sphi 0, %s64
      %s79 = sphi 0, %s65
      %s85 = sphi 0, %s87
      %s88 = sphi 0, %s85
      %s89 = sphi 0, %s88
      %s105 = sphi 0, %s89
      %s111 = sphi 0, %s113
      %s114 = sphi 0, %s111
      %s115 = sphi 0, %s114
      %s131 = sphi 0, %s115
      %s135 = sphi 0, %s135
      %s137 = sphi 0, %s135
      %s138 = sphi 0, %s137
      %s152 = sphi 0, %s138
    $region4: #{tpu_custom_call.1} parent=1 // loop_header_branch
      %15 = sbr.rel (%p13) target = $region8
    $region5: #{tpu_custom_call.1} parent=1 // loop_body
      %s17 = ssub.s32 %s12, 1
      %s18 = ssub.s32 %s12, 2
      %s19 = sadd.s32 %s12, 1
      %s21 = sadd.s32 %s20, 1
      %p24 = scmp.eq.s32.totalorder %s12, 1
      %p25 = scmp.ne.s32.totalorder %s20, %s22
      %p26 = scmp.eq.s32.totalorder %s12, 0
      %p27 = por %p25, %p26
      %p28 = scmp.ne.s32.totalorder %s20, %s22
      %p29 = scmp.eq.s32.totalorder %s17, 1
      %p30 = por %p28, %p29
      %p31 = scmp.ne.s32.totalorder %s22, %s23
      %p32 = scmp.eq.s32.totalorder %s17, 0
      %p33 = por %p31, %p32
      %p34 = scmp.ne.s32.totalorder %s22, %s23
      %p35 = scmp.eq.s32.totalorder %s18, 1
      %p36 = por %p34, %p35
      %p38 = scmp.ne.s32.totalorder %s23, %s37
      %p39 = scmp.eq.s32.totalorder %s18, 0
      %p40 = por %p38, %p39
      %s42 = sadd.s32 %s41, 1
      %p45 = scmp.eq.s32.totalorder %s12, 1
      %p46 = scmp.ne.s32.totalorder %s41, %s43
      %p47 = scmp.eq.s32.totalorder %s12, 0
      %p48 = por %p46, %p47
      %p49 = scmp.ne.s32.totalorder %s41, %s43
      %p50 = scmp.eq.s32.totalorder %s17, 1
      %p51 = por %p49, %p50
      %p52 = scmp.ne.s32.totalorder %s43, %s44
      %p53 = scmp.eq.s32.totalorder %s17, 0
      %p54 = por %p52, %p53
      %p55 = scmp.ne.s32.totalorder %s43, %s44
      %p56 = scmp.eq.s32.totalorder %s18, 1
      %p57 = por %p55, %p56
      %p59 = scmp.ne.s32.totalorder %s44, %s58
      %p60 = scmp.eq.s32.totalorder %s18, 0
      %p61 = por %p59, %p60
      %s63 = sadd.s32 %s62, 1
      %p66 = scmp.eq.s32.totalorder %s12, 1
      %p67 = scmp.ne.s32.totalorder %s62, %s64
      %p68 = scmp.eq.s32.totalorder %s12, 0
      %p69 = por %p67, %p68
      %p70 = scmp.ne.s32.totalorder %s62, %s64
      %p71 = scmp.eq.s32.totalorder %s17, 1
      %p72 = por %p70, %p71
      %p73 = scmp.ne.s32.totalorder %s64, %s65
      %p74 = scmp.eq.s32.totalorder %s17, 0
      %p75 = por %p73, %p74
      %p76 = scmp.ne.s32.totalorder %s64, %s65
      %p77 = scmp.eq.s32.totalorder %s18, 1
      %p78 = por %p76, %p77
      %p80 = scmp.ne.s32.totalorder %s65, %s79
      %p81 = scmp.eq.s32.totalorder %s18, 0
      %p82 = por %p80, %p81
      %s83 = ssub.s32 %s12, %s19
      %p84 = scmp.eq.s32.totalorder %s83, 0
      %s86 = sadd.s32 %s85, 1
      %s87 = scalar_select %p84, %s85, %s86
      %p90 = pneg %p84
      %p91 = scmp.eq.s32.totalorder %s12, 1
      %p92 = por %p90, %p91
      %p93 = scmp.ne.s32.totalorder %s85, %s88
      %p94 = scmp.eq.s32.totalorder %s12, 0
      %p95 = por %p93, %p94
      %p96 = scmp.ne.s32.totalorder %s85, %s88
      %p97 = scmp.eq.s32.totalorder %s17, 1
      %p98 = por %p96, %p97
      %p99 = scmp.ne.s32.totalorder %s88, %s89
      %p100 = scmp.eq.s32.totalorder %s17, 0
      %p101 = por %p99, %p100
      %p102 = scmp.ne.s32.totalorder %s88, %s89
      %p103 = scmp.eq.s32.totalorder %s18, 1
      %p104 = por %p102, %p103
      %p106 = scmp.ne.s32.totalorder %s89, %s105
      %p107 = scmp.eq.s32.totalorder %s18, 0
      %p108 = por %p106, %p107
      %s109 = ssub.s32 %s12, %s19
      %p110 = scmp.eq.s32.totalorder %s109, 0
      %s112 = sadd.s32 %s111, 1
      %s113 = scalar_select %p110, %s111, %s112
      %p116 = pneg %p110
      %p117 = scmp.eq.s32.totalorder %s12, 1
      %p118 = por %p116, %p117
      %p119 = scmp.ne.s32.totalorder %s111, %s114
      %p120 = scmp.eq.s32.totalorder %s12, 0
      %p121 = por %p119, %p120
      %p122 = scmp.ne.s32.totalorder %s111, %s114
      %p123 = scmp.eq.s32.totalorder %s17, 1
      %p124 = por %p122, %p123
      %p125 = scmp.ne.s32.totalorder %s114, %s115
      %p126 = scmp.eq.s32.totalorder %s17, 0
      %p127 = por %p125, %p126
      %p128 = scmp.ne.s32.totalorder %s114, %s115
      %p129 = scmp.eq.s32.totalorder %s18, 1
      %p130 = por %p128, %p129
      %p132 = scmp.ne.s32.totalorder %s115, %s131
      %p133 = scmp.eq.s32.totalorder %s18, 0
      %p134 = por %p132, %p133
      %s136 = sadd.s32 %s135, 1
      %p139 = scmp.eq.s32.totalorder %s12, 1
      %p140 = scmp.ne.s32.totalorder %s135, %s137
      %p141 = scmp.eq.s32.totalorder %s12, 0
      %p142 = por %p140, %p141
      %p143 = scmp.ne.s32.totalorder %s135, %s137
      %p144 = scmp.eq.s32.totalorder %s17, 1
      %p145 = por %p143, %p144
      %p146 = scmp.ne.s32.totalorder %s137, %s138
      %p147 = scmp.eq.s32.totalorder %s17, 0
      %p148 = por %p146, %p147
      %p149 = scmp.ne.s32.totalorder %s137, %s138
      %p150 = scmp.eq.s32.totalorder %s18, 1
      %p151 = por %p149, %p150
      %p153 = scmp.ne.s32.totalorder %s138, %s152
      %p154 = scmp.eq.s32.totalorder %s18, 0
      %p155 = por %p153, %p154
      %p156 = scmp.le.s32.totalorder 1, %s12
      %p157 = scmp.lt.s32.totalorder %s12, 3
      %p158 = pnand %p156, %p157
      %p159 = pneg %p158
      // Predicated region
      $region9: #{tpu_custom_call.1} parent=5 // pred_check
        _
      $region10: #{tpu_custom_call.1} parent=5 // pred_check_branch
        %161 = sbr.rel (%p158) target = $region12
      $region11: #{tpu_custom_call.1} parent=5 // pred_region
        %s162 = ssub.s32 %s12, 1
        // Predicated region
        $region13: #{tpu_custom_call.1} parent=11 // pred_check
          %p163 = pneg %p33
        $region14: #{tpu_custom_call.1} parent=11 // pred_check_branch
          %165 = sbr.rel (%p163) target = $region16
        $region15: #{tpu_custom_call.1} parent=11 // pred_region
          _
        $region16: #{tpu_custom_call.1} parent=11 // pred_fallthru
          _
        // Predicated region
        $region17: #{tpu_custom_call.1} parent=11 // pred_check
          %p166 = pneg %p54
        $region18: #{tpu_custom_call.1} parent=11 // pred_check_branch
          %168 = sbr.rel (%p166) target = $region20
        $region19: #{tpu_custom_call.1} parent=11 // pred_region
          _
        $region20: #{tpu_custom_call.1} parent=11 // pred_fallthru
          _
        // Predicated region
        $region21: #{tpu_custom_call.1} parent=11 // pred_check
          %p169 = pneg %p75
        $region22: #{tpu_custom_call.1} parent=11 // pred_check_branch
          %171 = sbr.rel (%p169) target = $region24
        $region23: #{tpu_custom_call.1} parent=11 // pred_region
          _
        $region24: #{tpu_custom_call.1} parent=11 // pred_fallthru
          _
      $region12: #{tpu_custom_call.1} parent=5 // pred_fallthru
        _
      %p172 = scmp.lt.s32.totalorder %s12, 2
      // Predicated region
      $region25: #{tpu_custom_call.1} parent=5 // pred_check
        %p173 = pneg %p172
      $region26: #{tpu_custom_call.1} parent=5 // pred_check_branch
        %175 = sbr.rel (%p173) target = $region28
      $region27: #{tpu_custom_call.1} parent=5 // pred_region
        // Predicated region
        $region29: #{tpu_custom_call.1} parent=27 // pred_check
          %p176 = pneg %p95
        $region30: #{tpu_custom_call.1} parent=27 // pred_check_branch
          %178 = sbr.rel (%p176) target = $region32
        $region31: #{tpu_custom_call.1} parent=27 // pred_region
          %p179 = scmp.lt.s32.totalorder %s12, 1
          %s180 = scalar_select %p179, %s12, 1
          %s181 = smul.addr %s180, 24
          %s182 = smul.addr %s181, 4
          %s183 = scalar_lea.vmem %s3, %s182
        $region32: #{tpu_custom_call.1} parent=27 // pred_fallthru
          _
        // Predicated region
        $region33: #{tpu_custom_call.1} parent=27 // pred_check
          %p184 = pneg %p121
        $region34: #{tpu_custom_call.1} parent=27 // pred_check_branch
          %186 = sbr.rel (%p184) target = $region36
        $region35: #{tpu_custom_call.1} parent=27 // pred_region
          %p187 = scmp.lt.s32.totalorder %s12, 1
          %s188 = scalar_select %p187, %s12, 1
          %s189 = smul.addr %s188, 2
          %s190 = smul.addr %s189, 8
          %s191 = scalar_lea.vmem %s4, %s190
        $region36: #{tpu_custom_call.1} parent=27 // pred_fallthru
          _
      $region28: #{tpu_custom_call.1} parent=5 // pred_fallthru
        _
      %p192 = scmp.le.s32.totalorder 1, %s12
      %p193 = scmp.lt.s32.totalorder %s12, 3
      %p194 = pnand %p192, %p193
      %p195 = pneg %p194
      // Predicated region
      $region37: #{tpu_custom_call.1} parent=5 // pred_check
        _
      $region38: #{tpu_custom_call.1} parent=5 // pred_check_branch
        %197 = sbr.rel (%p194) target = $region40
      $region39: #{tpu_custom_call.1} parent=5 // pred_region
        %s198 = ssub.s32 %s12, 1
        %p199 = pneg %p33
        %p200 = pneg %p30
        %p201 = pneg %p54
        %p202 = pneg %p51
        %p203 = pneg %p75
        %p204 = pneg %p72
        %p205 = scmp.lt.s32.totalorder %s17, 1
        %s206 = scalar_select %p205, %s17, 1
        %s207 = smul.addr %s206, 24
        %s208 = smul.addr %s207, 4
        %s209 = scalar_lea.vmem %s3, %s208
        %p210 = pneg %p101
        %p211 = pneg %p98
        %p212 = scmp.lt.s32.totalorder %s17, 1
        %s213 = scalar_select %p212, %s17, 1
        %s214 = smul.addr %s213, 2
        %s215 = smul.addr %s214, 8
        %s216 = scalar_lea.vmem %s4, %s215
        %p217 = pneg %p127
        %p218 = pneg %p124
        %p219 = pneg %p148
        %p220 = pneg %p145
        %p221 = scmp.lt.s32.totalorder %s17, 1
        %s222 = scalar_select %p221, %s17, 1
        %s223 = smul.addr %s222, 24
        %s224 = smul.addr %s223, 4
        %s225 = scalar_lea.vmem %s3, %s224
        %p226 = scmp.lt.s32.totalorder %s17, 1
        %s227 = scalar_select %p226, %s17, 1
        %s228 = smul.addr %s227, 2
        %s229 = smul.addr %s228, 8
        %s230 = scalar_lea.vmem %s4, %s229
        %p232 = scmp.eq.s32.totalorder %s17, 0
        // Predicated region
        $region41: #{tpu_custom_call.1} parent=39 // pred_check
          %p233 = pneg %p232
        $region42: #{tpu_custom_call.1} parent=39 // pred_check_branch
          %235 = sbr.rel (%p233) target = $region44
        $region43: #{tpu_custom_call.1} parent=39 // pred_region
          %v236 = vld [vmem:[%s0] sm:$0xff]
          %v237 = vld [vmem:[%s0 + $0x8] sm:$0xff]
          %vm238 = vcmask 261120
          %239 = vst.msk [vmem:[#allocation2] sm:$0xff] %vm238, %v236
          %240 = vst.msk [vmem:[#allocation2 + $0x8] sm:$0xff] %vm238, %v237
        $region44: #{tpu_custom_call.1} parent=39 // pred_fallthru
          _
        %v241 = vld [vmem:[#allocation2] sm:$0xff]
        %v242 = vld [vmem:[#allocation2 + $0x8] sm:$0xff]
        %v243 = vld [vmem:[%s1] sm:$0xff]
        %v244 = vld [vmem:[%s1 + $0x8] sm:$0xff]
        %v245 = vld [vmem:[%s225] sm:$0xf]
        %v246 = vld [vmem:[%s225 + $0x4] sm:$0xf]
        %v247 = vld [vmem:[%s225 + $0x8] sm:$0xf]
        %v248 = vld [vmem:[%s225 + $0xc] sm:$0xf]
        %v249 = vld [vmem:[%s225 + $0x10] sm:$0xf]
        %v250 = vld [vmem:[%s225 + $0x14] sm:$0xf]
        %v251 = vld [vmem:[%s225 + $0x18] sm:$0xf]
        %v252 = vld [vmem:[%s225 + $0x1c] sm:$0xf]
        %v253 = vld [vmem:[%s225 + $0x20] sm:$0xf]
        %v254 = vld [vmem:[%s225 + $0x24] sm:$0xf]
        %v255 = vld [vmem:[%s225 + $0x28] sm:$0xf]
        %v256 = vld [vmem:[%s225 + $0x2c] sm:$0xf]
        %v257 = vld [vmem:[%s225 + $0x30] sm:$0xf]
        %v258 = vld [vmem:[%s225 + $0x34] sm:$0xf]
        %v259 = vld [vmem:[%s225 + $0x38] sm:$0xf]
        %v260 = vld [vmem:[%s225 + $0x3c] sm:$0xf]
        %v261 = vld [vmem:[%s225 + $0x40] sm:$0xf]
        %v262 = vld [vmem:[%s225 + $0x44] sm:$0xf]
        %v263 = vld [vmem:[%s225 + $0x48] sm:$0xf]
        %v264 = vld [vmem:[%s225 + $0x4c] sm:$0xf]
        %v265 = vld [vmem:[%s225 + $0x50] sm:$0xf]
        %v266 = vld [vmem:[%s225 + $0x54] sm:$0xf]
        %v267 = vld [vmem:[%s225 + $0x58] sm:$0xf]
        %v268 = vld [vmem:[%s225 + $0x5c] sm:$0xf]
        %v269 = vld [vmem:[%s230] sm:$0x1]
        %v270 = vld [vmem:[%s230 + $0x1] sm:$0x1]
        %v271 = vld [vmem:[%s230 + $0x2] sm:$0x1]
        %v272 = vld [vmem:[%s230 + $0x3] sm:$0x1]
        %v273 = vld [vmem:[%s230 + $0x4] sm:$0x1]
        %v274 = vld [vmem:[%s230 + $0x5] sm:$0x1]
        %v275 = vld [vmem:[%s230 + $0x6] sm:$0x1]
        %v276 = vld [vmem:[%s230 + $0x7] sm:$0x1]
        %v277 = vld [vmem:[%s230 + $0x8] sm:$0x1]
        %v278 = vld [vmem:[%s2] sm:$0xf]
        %v279 = vld [vmem:[%s2 + $0x4] sm:$0xf]
        %v280 = vld [vmem:[%s2 + $0x8] sm:$0xf]
        %v281 = vld [vmem:[%s2 + $0xc] sm:$0xf]
        %v282 = vld [vmem:[%s2 + $0x10] sm:$0xf]
        %v283 = vld [vmem:[%s2 + $0x14] sm:$0xf]
        %v284 = vld [vmem:[%s2 + $0x18] sm:$0xf]
        %v285 = vld [vmem:[%s2 + $0x1c] sm:$0xf]
        %v286 = vld [vmem:[%s2 + $0x20] sm:$0xf]
        %v287 = vld [vmem:[%s2 + $0x24] sm:$0xf]
        %v288 = vld [vmem:[%s2 + $0x28] sm:$0xf]
        %v289 = vld [vmem:[%s2 + $0x2c] sm:$0xf]
        %v290 = vld [vmem:[%s2 + $0x30] sm:$0xf]
        %v291 = vld [vmem:[%s2 + $0x34] sm:$0xf]
        %v292 = vld [vmem:[%s2 + $0x38] sm:$0xf]
        %v293 = vld [vmem:[%s2 + $0x3c] sm:$0xf]
        %v294 = vpack.c.bf16 %v242, %v241
        %v295 = vlaneseq
        %v296 = vshrl.u32 %v295, 7
        %v297 = vsub.s32 0, %v296
        %v298 = vrot.slane %v269, %v297
        %v303 = vunpack.c.l.b16 %v245
        %v304 = vunpack.c.l.b16 %v246
        %v305 = vunpack.c.l.b16 %v247
        %v306 = vunpack.c.l.b16 %v248
        %v307 = vpack.c.b16 %v304, %v303
        %v308 = vpack.c.b16 %v306, %v305
        %vm311 = vcmask 261120
        %v313 = vsel %vm311, %v294, 0
        %315 = vmatprep.subr.bf16.mxu0 0
        %316 = vmatpush1.bf16.msra.mxu0 %v307
        %317 = vmatprep.subr.bf16.mxu0 0
        %318 = vmatpush1.bf16.msra.mxu0 %v308
        %319 = vmatprep.subr.bf16.mxu0 0
        %320 = vmatpush1.bf16.msra.mxu0 0
        %321 = vmatprep.subr.bf16.mxu0 0
        %322 = vmatpush1.bf16.msra.mxu0 0
        %323 = vmatprep.subr.bf16.mxu0 0
        %324 = vmatpush1.bf16.msra.mxu0 0
        %325 = vmatprep.subr.bf16.mxu0 0
        %326 = vmatpush1.bf16.msra.mxu0 0
        %327 = vmatprep.subr.bf16.mxu0 0
        %328 = vmatpush1.bf16.msra.mxu0 0
        %329 = vmatprep.subr.bf16.mxu0 0
        %330 = vmatpush1.bf16.msra.mxu0 0
        %331 = vmatprep.subr.bf16.mxu0 0
        %332 = vmatpush1.bf16.msra.mxu0 0
        %333 = vmatprep.subr.bf16.mxu0 0
        %334 = vmatpush1.bf16.msra.mxu0 0
        %335 = vmatprep.subr.bf16.mxu0 0
        %336 = vmatpush1.bf16.msra.mxu0 0
        %337 = vmatprep.subr.bf16.mxu0 0
        %338 = vmatpush1.bf16.msra.mxu0 0
        %339 = vmatprep.subr.bf16.mxu0 0
        %340 = vmatpush1.bf16.msra.mxu0 0
        %341 = vmatprep.subr.bf16.mxu0 0
        %342 = vmatpush1.bf16.msra.mxu0 0
        %343 = vmatprep.subr.bf16.mxu0 0
        %344 = vmatpush1.bf16.msra.mxu0 0
        %345 = vmatprep.subr.bf16.mxu0 0
        %346 = vmatpush1.bf16.msra.mxu0 0
        %347 = vmatprep.mubr.bf16.mxu0 0
        %348 = vmatmul.mubr.bf16.gmra.mrb[0].mxu0 %v313
        %v349 = vpop.f32.mrb[0].mxu0
        %v350 = vadd.f32 %v298, %v349
        %v351 = vpop.f32.mrb[0].mxu0
        %v352 = vpop.f32.mrb[0].mxu0
        %v353 = vadd.f32 %v298, %v352
        %v354 = vpop.f32.mrb[0].mxu0
        %355 = vdwg.mxu0
        %v356 = vlaneseq
        %v357 = vshrl.u32 %v356, 7
        %v358 = vsub.s32 0, %v357
        %v359 = vrot.slane %v270, %v358
        %v364 = vunpack.c.l.b16 %v249
        %v365 = vunpack.c.l.b16 %v250
        %v366 = vunpack.c.l.b16 %v251
        %v367 = vunpack.c.l.b16 %v252
        %v368 = vpack.c.b16 %v365, %v364
        %v369 = vpack.c.b16 %v367, %v366
        %372 = vmatprep.subr.bf16.mxu0 0
        %373 = vmatpush1.bf16.msra.mxu0 %v368
        %374 = vmatprep.subr.bf16.mxu0 0
        %375 = vmatpush1.bf16.msra.mxu0 %v369
        %376 = vmatprep.subr.bf16.mxu0 0
        %377 = vmatpush1.bf16.msra.mxu0 0
        %378 = vmatprep.subr.bf16.mxu0 0
        %379 = vmatpush1.bf16.msra.mxu0 0
        %380 = vmatprep.subr.bf16.mxu0 0
        %381 = vmatpush1.bf16.msra.mxu0 0
        %382 = vmatprep.subr.bf16.mxu0 0
        %383 = vmatpush1.bf16.msra.mxu0 0
        %384 = vmatprep.subr.bf16.mxu0 0
        %385 = vmatpush1.bf16.msra.mxu0 0
        %386 = vmatprep.subr.bf16.mxu0 0
        %387 = vmatpush1.bf16.msra.mxu0 0
        %388 = vmatprep.subr.bf16.mxu0 0
        %389 = vmatpush1.bf16.msra.mxu0 0
        %390 = vmatprep.subr.bf16.mxu0 0
        %391 = vmatpush1.bf16.msra.mxu0 0
        %392 = vmatprep.subr.bf16.mxu0 0
        %393 = vmatpush1.bf16.msra.mxu0 0
        %394 = vmatprep.subr.bf16.mxu0 0
        %395 = vmatpush1.bf16.msra.mxu0 0
        %396 = vmatprep.subr.bf16.mxu0 0
        %397 = vmatpush1.bf16.msra.mxu0 0
        %398 = vmatprep.subr.bf16.mxu0 0
        %399 = vmatpush1.bf16.msra.mxu0 0
        %400 = vmatprep.subr.bf16.mxu0 0
        %401 = vmatpush1.bf16.msra.mxu0 0
        %402 = vmatprep.subr.bf16.mxu0 0
        %403 = vmatpush1.bf16.msra.mxu0 0
        %404 = vmatprep.mubr.bf16.mxu0 0
        %405 = vmatmul.mubr.bf16.gmra.mrb[0].mxu0 %v313
        %v406 = vpop.f32.mrb[0].mxu0
        %v407 = vadd.f32 %v359, %v406
        %v408 = vpop.f32.mrb[0].mxu0
        %v409 = vpop.f32.mrb[0].mxu0
        %v410 = vadd.f32 %v359, %v409
        %v411 = vpop.f32.mrb[0].mxu0
        %412 = vdwg.mxu0
        %v413 = vpack.c.bf16 %v353, %v350
        %v414 = vpack.c.bf16 %v410, %v407
        %v419 = vunpack.c.l.b16 %v278
        %v420 = vunpack.c.l.b16 %v279
        %v421 = vunpack.c.l.b16 %v280
        %v422 = vunpack.c.l.b16 %v281
        %v423 = vpack.c.b16 %v420, %v419
        %v424 = vpack.c.b16 %v422, %v421
        %v428 = vsel %vm311, %v413, 0
        %430 = vmatprep.subr.bf16.mxu0 0
        %431 = vmatpush1.bf16.msra.mxu0 %v423
        %432 = vmatprep.subr.bf16.mxu0 0
        %433 = vmatpush1.bf16.msra.mxu0 %v424
        %434 = vmatprep.subr.bf16.mxu0 0
        %435 = vmatpush1.bf16.msra.mxu0 0
        %436 = vmatprep.subr.bf16.mxu0 0
        %437 = vmatpush1.bf16.msra.mxu0 0
        %438 = vmatprep.subr.bf16.mxu0 0
        %439 = vmatpush1.bf16.msra.mxu0 0
        %440 = vmatprep.subr.bf16.mxu0 0
        %441 = vmatpush1.bf16.msra.mxu0 0
        %442 = vmatprep.subr.bf16.mxu0 0
        %443 = vmatpush1.bf16.msra.mxu0 0
        %444 = vmatprep.subr.bf16.mxu0 0
        %445 = vmatpush1.bf16.msra.mxu0 0
        %446 = vmatprep.subr.bf16.mxu0 0
        %447 = vmatpush1.bf16.msra.mxu0 0
        %448 = vmatprep.subr.bf16.mxu0 0
        %449 = vmatpush1.bf16.msra.mxu0 0
        %450 = vmatprep.subr.bf16.mxu0 0
        %451 = vmatpush1.bf16.msra.mxu0 0
        %452 = vmatprep.subr.bf16.mxu0 0
        %453 = vmatpush1.bf16.msra.mxu0 0
        %454 = vmatprep.subr.bf16.mxu0 0
        %455 = vmatpush1.bf16.msra.mxu0 0
        %456 = vmatprep.subr.bf16.mxu0 0
        %457 = vmatpush1.bf16.msra.mxu0 0
        %458 = vmatprep.subr.bf16.mxu0 0
        %459 = vmatpush1.bf16.msra.mxu0 0
        %460 = vmatprep.subr.bf16.mxu0 0
        %461 = vmatpush1.bf16.msra.mxu0 0
        %462 = vmatprep.mubr.bf16.mxu0 0
        %463 = vmatmul.mubr.bf16.gmra.mrb[0].mxu0 %v428
        %v464 = vpop.f32.mrb[0].mxu0
        %v465 = vadd.f32 0.0, %v464
        %v466 = vpop.f32.mrb[0].mxu0
        %v467 = vpop.f32.mrb[0].mxu0
        %v468 = vadd.f32 0.0, %v467
        %v469 = vpop.f32.mrb[0].mxu0
        %470 = vdwg.mxu0
        %v475 = vunpack.c.l.b16 %v282
        %v476 = vunpack.c.l.b16 %v283
        %v477 = vunpack.c.l.b16 %v284
        %v478 = vunpack.c.l.b16 %v285
        %v479 = vpack.c.b16 %v476, %v475
        %v480 = vpack.c.b16 %v478, %v477
        %483 = vmatprep.subr.bf16.mxu0 0
        %484 = vmatpush1.bf16.msra.mxu0 %v479
        %485 = vmatprep.subr.bf16.mxu0 0
        %486 = vmatpush1.bf16.msra.mxu0 %v480
        %487 = vmatprep.subr.bf16.mxu0 0
        %488 = vmatpush1.bf16.msra.mxu0 0
        %489 = vmatprep.subr.bf16.mxu0 0
        %490 = vmatpush1.bf16.msra.mxu0 0
        %491 = vmatprep.subr.bf16.mxu0 0
        %492 = vmatpush1.bf16.msra.mxu0 0
        %493 = vmatprep.subr.bf16.mxu0 0
        %494 = vmatpush1.bf16.msra.mxu0 0
        %495 = vmatprep.subr.bf16.mxu0 0
        %496 = vmatpush1.bf16.msra.mxu0 0
        %497 = vmatprep.subr.bf16.mxu0 0
        %498 = vmatpush1.bf16.msra.mxu0 0
        %499 = vmatprep.subr.bf16.mxu0 0
        %500 = vmatpush1.bf16.msra.mxu0 0
        %501 = vmatprep.subr.bf16.mxu0 0
        %502 = vmatpush1.bf16.msra.mxu0 0
        %503 = vmatprep.subr.bf16.mxu0 0
        %504 = vmatpush1.bf16.msra.mxu0 0
        %505 = vmatprep.subr.bf16.mxu0 0
        %506 = vmatpush1.bf16.msra.mxu0 0
        %507 = vmatprep.subr.bf16.mxu0 0
        %508 = vmatpush1.bf16.msra.mxu0 0
        %509 = vmatprep.subr.bf16.mxu0 0
        %510 = vmatpush1.bf16.msra.mxu0 0
        %511 = vmatprep.subr.bf16.mxu0 0
        %512 = vmatpush1.bf16.msra.mxu0 0
        %513 = vmatprep.subr.bf16.mxu0 0
        %514 = vmatpush1.bf16.msra.mxu0 0
        %515 = vmatprep.mubr.bf16.mxu0 0
        %516 = vmatmul.mubr.bf16.gmra.mrb[0].mxu0 %v428
        %v517 = vpop.f32.mrb[0].mxu0
        %v518 = vadd.f32 0.0, %v517
        %v519 = vpop.f32.mrb[0].mxu0
        %v520 = vpop.f32.mrb[0].mxu0
        %v521 = vadd.f32 0.0, %v520
        %v522 = vpop.f32.mrb[0].mxu0
        %523 = vdwg.mxu0
        %v528 = vunpack.c.l.b16 %v286
        %v529 = vunpack.c.l.b16 %v287
        %v530 = vunpack.c.l.b16 %v288
        %v531 = vunpack.c.l.b16 %v289
        %v532 = vpack.c.b16 %v529, %v528
        %v533 = vpack.c.b16 %v531, %v530
        %536 = vmatprep.subr.bf16.mxu0 0
        %537 = vmatpush1.bf16.msra.mxu0 %v532
        %538 = vmatprep.subr.bf16.mxu0 0
        %539 = vmatpush1.bf16.msra.mxu0 %v533
        %540 = vmatprep.subr.bf16.mxu0 0
        %541 = vmatpush1.bf16.msra.mxu0 0
        %542 = vmatprep.subr.bf16.mxu0 0
        %543 = vmatpush1.bf16.msra.mxu0 0
        %544 = vmatprep.subr.bf16.mxu0 0
        %545 = vmatpush1.bf16.msra.mxu0 0
        %546 = vmatprep.subr.bf16.mxu0 0
        %547 = vmatpush1.bf16.msra.mxu0 0
        %548 = vmatprep.subr.bf16.mxu0 0
        %549 = vmatpush1.bf16.msra.mxu0 0
        %550 = vmatprep.subr.bf16.mxu0 0
        %551 = vmatpush1.bf16.msra.mxu0 0
        %552 = vmatprep.subr.bf16.mxu0 0
        %553 = vmatpush1.bf16.msra.mxu0 0
        %554 = vmatprep.subr.bf16.mxu0 0
        %555 = vmatpush1.bf16.msra.mxu0 0
        %556 = vmatprep.subr.bf16.mxu0 0
        %557 = vmatpush1.bf16.msra.mxu0 0
        %558 = vmatprep.subr.bf16.mxu0 0
        %559 = vmatpush1.bf16.msra.mxu0 0
        %560 = vmatprep.subr.bf16.mxu0 0
        %561 = vmatpush1.bf16.msra.mxu0 0
        %562 = vmatprep.subr.bf16.mxu0 0
        %563 = vmatpush1.bf16.msra.mxu0 0
        %564 = vmatprep.subr.bf16.mxu0 0
        %565 = vmatpush1.bf16.msra.mxu0 0
        %566 = vmatprep.subr.bf16.mxu0 0
        %567 = vmatpush1.bf16.msra.mxu0 0
        %568 = vmatprep.mubr.bf16.mxu0 0
        %569 = vmatmul.mubr.bf16.gmra.mrb[0].mxu0 %v428
        %v570 = vpop.f32.mrb[0].mxu0
        %v571 = vadd.f32 0.0, %v570
        %v572 = vpop.f32.mrb[0].mxu0
        %v573 = vpop.f32.mrb[0].mxu0
        %v574 = vadd.f32 0.0, %v573
        %v575 = vpop.f32.mrb[0].mxu0
        %576 = vdwg.mxu0
        %v581 = vunpack.c.l.b16 %v290
        %v582 = vunpack.c.l.b16 %v291
        %v583 = vunpack.c.l.b16 %v292
        %v584 = vunpack.c.l.b16 %v293
        %v585 = vpack.c.b16 %v582, %v581
        %v586 = vpack.c.b16 %v584, %v583
        %589 = vmatprep.subr.bf16.mxu0 0
        %590 = vmatpush1.bf16.msra.mxu0 %v585
        %591 = vmatprep.subr.bf16.mxu0 0
        %592 = vmatpush1.bf16.msra.mxu0 %v586
        %593 = vmatprep.subr.bf16.mxu0 0
        %594 = vmatpush1.bf16.msra.mxu0 0
        %595 = vmatprep.subr.bf16.mxu0 0
        %596 = vmatpush1.bf16.msra.mxu0 0
        %597 = vmatprep.subr.bf16.mxu0 0
        %598 = vmatpush1.bf16.msra.mxu0 0
        %599 = vmatprep.subr.bf16.mxu0 0
        %600 = vmatpush1.bf16.msra.mxu0 0
        %601 = vmatprep.subr.bf16.mxu0 0
        %602 = vmatpush1.bf16.msra.mxu0 0
        %603 = vmatprep.subr.bf16.mxu0 0
        %604 = vmatpush1.bf16.msra.mxu0 0
        %605 = vmatprep.subr.bf16.mxu0 0
        %606 = vmatpush1.bf16.msra.mxu0 0
        %607 = vmatprep.subr.bf16.mxu0 0
        %608 = vmatpush1.bf16.msra.mxu0 0
        %609 = vmatprep.subr.bf16.mxu0 0
        %610 = vmatpush1.bf16.msra.mxu0 0
        %611 = vmatprep.subr.bf16.mxu0 0
        %612 = vmatpush1.bf16.msra.mxu0 0
        %613 = vmatprep.subr.bf16.mxu0 0
        %614 = vmatpush1.bf16.msra.mxu0 0
        %615 = vmatprep.subr.bf16.mxu0 0
        %616 = vmatpush1.bf16.msra.mxu0 0
        %617 = vmatprep.subr.bf16.mxu0 0
        %618 = vmatpush1.bf16.msra.mxu0 0
        %619 = vmatprep.subr.bf16.mxu0 0
        %620 = vmatpush1.bf16.msra.mxu0 0
        %621 = vmatprep.mubr.bf16.mxu0 0
        %622 = vmatmul.mubr.bf16.gmra.mrb[0].mxu0 %v428
        %v623 = vpop.f32.mrb[0].mxu0
        %v624 = vadd.f32 0.0, %v623
        %v625 = vpop.f32.mrb[0].mxu0
        %v626 = vpop.f32.mrb[0].mxu0
        %v627 = vadd.f32 0.0, %v626
        %v628 = vpop.f32.mrb[0].mxu0
        %629 = vdwg.mxu0
        %v631 = vsel %vm311, %v414, 0
        %633 = vmatprep.subr.bf16.mxu0 0
        %634 = vmatpush1.bf16.msra.mxu0 %v423
        %635 = vmatprep.subr.bf16.mxu0 0
        %636 = vmatpush1.bf16.msra.mxu0 %v424
        %637 = vmatprep.subr.bf16.mxu0 0
        %638 = vmatpush1.bf16.msra.mxu0 0
        %639 = vmatprep.subr.bf16.mxu0 0
        %640 = vmatpush1.bf16.msra.mxu0 0
        %641 = vmatprep.subr.bf16.mxu0 0
        %642 = vmatpush1.bf16.msra.mxu0 0
        %643 = vmatprep.subr.bf16.mxu0 0
        %644 = vmatpush1.bf16.msra.mxu0 0
        %645 = vmatprep.subr.bf16.mxu0 0
        %646 = vmatpush1.bf16.msra.mxu0 0
        %647 = vmatprep.subr.bf16.mxu0 0
        %648 = vmatpush1.bf16.msra.mxu0 0
        %649 = vmatprep.subr.bf16.mxu0 0
        %650 = vmatpush1.bf16.msra.mxu0 0
        %651 = vmatprep.subr.bf16.mxu0 0
        %652 = vmatpush1.bf16.msra.mxu0 0
        %653 = vmatprep.subr.bf16.mxu0 0
        %654 = vmatpush1.bf16.msra.mxu0 0
        %655 = vmatprep.subr.bf16.mxu0 0
        %656 = vmatpush1.bf16.msra.mxu0 0
        %657 = vmatprep.subr.bf16.mxu0 0
        %658 = vmatpush1.bf16.msra.mxu0 0
        %659 = vmatprep.subr.bf16.mxu0 0
        %660 = vmatpush1.bf16.msra.mxu0 0
        %661 = vmatprep.subr.bf16.mxu0 0
        %662 = vmatpush1.bf16.msra.mxu0 0
        %663 = vmatprep.subr.bf16.mxu0 0
        %664 = vmatpush1.bf16.msra.mxu0 0
        %665 = vmatprep.mubr.bf16.mxu0 0
        %666 = vmatmul.mubr.bf16.gmra.mrb[0].mxu0 %v631
        %v667 = vpop.f32.mrb[0].mxu0
        %v668 = vadd.f32 0.0, %v667
        %v669 = vpop.f32.mrb[0].mxu0
        %v670 = vpop.f32.mrb[0].mxu0
        %v671 = vadd.f32 0.0, %v670
        %v672 = vpop.f32.mrb[0].mxu0
        %673 = vdwg.mxu0
        %674 = vmatprep.subr.bf16.mxu0 0
        %675 = vmatpush1.bf16.msra.mxu0 %v479
        %676 = vmatprep.subr.bf16.mxu0 0
        %677 = vmatpush1.bf16.msra.mxu0 %v480
        %678 = vmatprep.subr.bf16.mxu0 0
        %679 = vmatpush1.bf16.msra.mxu0 0
        %680 = vmatprep.subr.bf16.mxu0 0
        %681 = vmatpush1.bf16.msra.mxu0 0
        %682 = vmatprep.subr.bf16.mxu0 0
        %683 = vmatpush1.bf16.msra.mxu0 0
        %684 = vmatprep.subr.bf16.mxu0 0
        %685 = vmatpush1.bf16.msra.mxu0 0
        %686 = vmatprep.subr.bf16.mxu0 0
        %687 = vmatpush1.bf16.msra.mxu0 0
        %688 = vmatprep.subr.bf16.mxu0 0
        %689 = vmatpush1.bf16.msra.mxu0 0
        %690 = vmatprep.subr.bf16.mxu0 0
        %691 = vmatpush1.bf16.msra.mxu0 0
        %692 = vmatprep.subr.bf16.mxu0 0
        %693 = vmatpush1.bf16.msra.mxu0 0
        %694 = vmatprep.subr.bf16.mxu0 0
        %695 = vmatpush1.bf16.msra.mxu0 0
        %696 = vmatprep.subr.bf16.mxu0 0
        %697 = vmatpush1.bf16.msra.mxu0 0
        %698 = vmatprep.subr.bf16.mxu0 0
        %699 = vmatpush1.bf16.msra.mxu0 0
        %700 = vmatprep.subr.bf16.mxu0 0
        %701 = vmatpush1.bf16.msra.mxu0 0
        %702 = vmatprep.subr.bf16.mxu0 0
        %703 = vmatpush1.bf16.msra.mxu0 0
        %704 = vmatprep.subr.bf16.mxu0 0
        %705 = vmatpush1.bf16.msra.mxu0 0
        %706 = vmatprep.mubr.bf16.mxu0 0
        %707 = vmatmul.mubr.bf16.gmra.mrb[0].mxu0 %v631
        %v708 = vpop.f32.mrb[0].mxu0
        %v709 = vadd.f32 0.0, %v708
        %v710 = vpop.f32.mrb[0].mxu0
        %v711 = vpop.f32.mrb[0].mxu0
        %v712 = vadd.f32 0.0, %v711
        %v713 = vpop.f32.mrb[0].mxu0
        %714 = vdwg.mxu0
        %715 = vmatprep.subr.bf16.mxu0 0
        %716 = vmatpush1.bf16.msra.mxu0 %v532
        %717 = vmatprep.subr.bf16.mxu0 0
        %718 = vmatpush1.bf16.msra.mxu0 %v533
        %719 = vmatprep.subr.bf16.mxu0 0
        %720 = vmatpush1.bf16.msra.mxu0 0
        %721 = vmatprep.subr.bf16.mxu0 0
        %722 = vmatpush1.bf16.msra.mxu0 0
        %723 = vmatprep.subr.bf16.mxu0 0
        %724 = vmatpush1.bf16.msra.mxu0 0
        %725 = vmatprep.subr.bf16.mxu0 0
        %726 = vmatpush1.bf16.msra.mxu0 0
        %727 = vmatprep.subr.bf16.mxu0 0
        %728 = vmatpush1.bf16.msra.mxu0 0
        %729 = vmatprep.subr.bf16.mxu0 0
        %730 = vmatpush1.bf16.msra.mxu0 0
        %731 = vmatprep.subr.bf16.mxu0 0
        %732 = vmatpush1.bf16.msra.mxu0 0
        %733 = vmatprep.subr.bf16.mxu0 0
        %734 = vmatpush1.bf16.msra.mxu0 0
        %735 = vmatprep.subr.bf16.mxu0 0
        %736 = vmatpush1.bf16.msra.mxu0 0
        %737 = vmatprep.subr.bf16.mxu0 0
        %738 = vmatpush1.bf16.msra.mxu0 0
        %739 = vmatprep.subr.bf16.mxu0 0
        %740 = vmatpush1.bf16.msra.mxu0 0
        %741 = vmatprep.subr.bf16.mxu0 0
        %742 = vmatpush1.bf16.msra.mxu0 0
        %743 = vmatprep.subr.bf16.mxu0 0
        %744 = vmatpush1.bf16.msra.mxu0 0
        %745 = vmatprep.subr.bf16.mxu0 0
        %746 = vmatpush1.bf16.msra.mxu0 0
        %747 = vmatprep.mubr.bf16.mxu0 0
        %748 = vmatmul.mubr.bf16.gmra.mrb[0].mxu0 %v631
        %v749 = vpop.f32.mrb[0].mxu0
        %v750 = vadd.f32 0.0, %v749
        %v751 = vpop.f32.mrb[0].mxu0
        %v752 = vpop.f32.mrb[0].mxu0
        %v753 = vadd.f32 0.0, %v752
        %v754 = vpop.f32.mrb[0].mxu0
        %755 = vdwg.mxu0
        %756 = vmatprep.subr.bf16.mxu0 0
        %757 = vmatpush1.bf16.msra.mxu0 %v585
        %758 = vmatprep.subr.bf16.mxu0 0
        %759 = vmatpush1.bf16.msra.mxu0 %v586
        %760 = vmatprep.subr.bf16.mxu0 0
        %761 = vmatpush1.bf16.msra.mxu0 0
        %762 = vmatprep.subr.bf16.mxu0 0
        %763 = vmatpush1.bf16.msra.mxu0 0
        %764 = vmatprep.subr.bf16.mxu0 0
        %765 = vmatpush1.bf16.msra.mxu0 0
        %766 = vmatprep.subr.bf16.mxu0 0
        %767 = vmatpush1.bf16.msra.mxu0 0
        %768 = vmatprep.subr.bf16.mxu0 0
        %769 = vmatpush1.bf16.msra.mxu0 0
        %770 = vmatprep.subr.bf16.mxu0 0
        %771 = vmatpush1.bf16.msra.mxu0 0
        %772 = vmatprep.subr.bf16.mxu0 0
        %773 = vmatpush1.bf16.msra.mxu0 0
        %774 = vmatprep.subr.bf16.mxu0 0
        %775 = vmatpush1.bf16.msra.mxu0 0
        %776 = vmatprep.subr.bf16.mxu0 0
        %777 = vmatpush1.bf16.msra.mxu0 0
        %778 = vmatprep.subr.bf16.mxu0 0
        %779 = vmatpush1.bf16.msra.mxu0 0
        %780 = vmatprep.subr.bf16.mxu0 0
        %781 = vmatpush1.bf16.msra.mxu0 0
        %782 = vmatprep.subr.bf16.mxu0 0
        %783 = vmatpush1.bf16.msra.mxu0 0
        %784 = vmatprep.subr.bf16.mxu0 0
        %785 = vmatpush1.bf16.msra.mxu0 0
        %786 = vmatprep.subr.bf16.mxu0 0
        %787 = vmatpush1.bf16.msra.mxu0 0
        %788 = vmatprep.mubr.bf16.mxu0 0
        %789 = vmatmul.mubr.bf16.gmra.mrb[0].mxu0 %v631
        %v790 = vpop.f32.mrb[0].mxu0
        %v791 = vadd.f32 0.0, %v790
        %v792 = vpop.f32.mrb[0].mxu0
        %v793 = vpop.f32.mrb[0].mxu0
        %v794 = vadd.f32 0.0, %v793
        %v795 = vpop.f32.mrb[0].mxu0
        %796 = vdwg.mxu0
        %v797 = vpack.c.bf16 %v468, %v465
        %v798 = vpack.c.bf16 %v521, %v518
        %v799 = vpack.c.bf16 %v574, %v571
        %v800 = vpack.c.bf16 %v627, %v624
        %v801 = vpack.c.bf16 %v671, %v668
        %v802 = vpack.c.bf16 %v712, %v709
        %v803 = vpack.c.bf16 %v753, %v750
        %v804 = vpack.c.bf16 %v794, %v791
        %vm805 = vcmask 64512
        %v807 = vsel %vm805, %v797, 0
        %v810 = vsel %vm805, %v801, 0
        %812 = vmatprep.subr.bf16.mxu0 0
        %813 = vmatpush1.bf16.xpose.msra.mxu0 %v810
        %814 = vmatprep.subr.bf16.mxu0 0
        %815 = vmatpush1.bf16.xpose.msra.mxu0 0
        %816 = vmatprep.subr.bf16.mxu0 0
        %817 = vmatpush1.bf16.xpose.msra.mxu0 0
        %818 = vmatprep.subr.bf16.mxu0 0
        %819 = vmatpush1.bf16.xpose.msra.mxu0 0
        %820 = vmatprep.subr.bf16.mxu0 0
        %821 = vmatpush1.bf16.xpose.msra.mxu0 0
        %822 = vmatprep.subr.bf16.mxu0 0
        %823 = vmatpush1.bf16.xpose.msra.mxu0 0
        %824 = vmatprep.subr.bf16.mxu0 0
        %825 = vmatpush1.bf16.xpose.msra.mxu0 0
        %826 = vmatprep.subr.bf16.mxu0 0
        %827 = vmatpush1.bf16.xpose.msra.mxu0 0
        %828 = vmatprep.subr.bf16.mxu0 0
        %829 = vmatpush1.bf16.xpose.msra.mxu0 0
        %830 = vmatprep.subr.bf16.mxu0 0
        %831 = vmatpush1.bf16.xpose.msra.mxu0 0
        %832 = vmatprep.subr.bf16.mxu0 0
        %833 = vmatpush1.bf16.xpose.msra.mxu0 0
        %834 = vmatprep.subr.bf16.mxu0 0
        %835 = vmatpush1.bf16.xpose.msra.mxu0 0
        %836 = vmatprep.subr.bf16.mxu0 0
        %837 = vmatpush1.bf16.xpose.msra.mxu0 0
        %838 = vmatprep.subr.bf16.mxu0 0
        %839 = vmatpush1.bf16.xpose.msra.mxu0 0
        %840 = vmatprep.subr.bf16.mxu0 0
        %841 = vmatpush1.bf16.xpose.msra.mxu0 0
        %842 = vmatprep.subr.bf16.mxu0 0
        %843 = vmatpush1.bf16.xpose.msra.mxu0 0
        %844 = vmatprep.mubr.bf16.mxu0 0
        %845 = vmatmul.mubr.bf16.gmra.mrb[0].mxu0 %v807
        %v846 = vpop.f32.mrb[0].mxu0
        %v847 = vadd.f32 %v243, %v846
        %v848 = vpop.f32.mrb[0].mxu0
        %v849 = vpop.f32.mrb[0].mxu0
        %v850 = vadd.f32 %v244, %v849
        %v851 = vpop.f32.mrb[0].mxu0
        %852 = vdwg.mxu0
        %v854 = vsel %vm805, %v798, 0
        %v857 = vsel %vm805, %v802, 0
        %859 = vmatprep.subr.bf16.mxu0 0
        %860 = vmatpush1.bf16.xpose.msra.mxu0 %v857
        %861 = vmatprep.subr.bf16.mxu0 0
        %862 = vmatpush1.bf16.xpose.msra.mxu0 0
        %863 = vmatprep.subr.bf16.mxu0 0
        %864 = vmatpush1.bf16.xpose.msra.mxu0 0
        %865 = vmatprep.subr.bf16.mxu0 0
        %866 = vmatpush1.bf16.xpose.msra.mxu0 0
        %867 = vmatprep.subr.bf16.mxu0 0
        %868 = vmatpush1.bf16.xpose.msra.mxu0 0
        %869 = vmatprep.subr.bf16.mxu0 0
        %870 = vmatpush1.bf16.xpose.msra.mxu0 0
        %871 = vmatprep.subr.bf16.mxu0 0
        %872 = vmatpush1.bf16.xpose.msra.mxu0 0
        %873 = vmatprep.subr.bf16.mxu0 0
        %874 = vmatpush1.bf16.xpose.msra.mxu0 0
        %875 = vmatprep.subr.bf16.mxu0 0
        %876 = vmatpush1.bf16.xpose.msra.mxu0 0
        %877 = vmatprep.subr.bf16.mxu0 0
        %878 = vmatpush1.bf16.xpose.msra.mxu0 0
        %879 = vmatprep.subr.bf16.mxu0 0
        %880 = vmatpush1.bf16.xpose.msra.mxu0 0
        %881 = vmatprep.subr.bf16.mxu0 0
        %882 = vmatpush1.bf16.xpose.msra.mxu0 0
        %883 = vmatprep.subr.bf16.mxu0 0
        %884 = vmatpush1.bf16.xpose.msra.mxu0 0
        %885 = vmatprep.subr.bf16.mxu0 0
        %886 = vmatpush1.bf16.xpose.msra.mxu0 0
        %887 = vmatprep.subr.bf16.mxu0 0
        %888 = vmatpush1.bf16.xpose.msra.mxu0 0
        %889 = vmatprep.subr.bf16.mxu0 0
        %890 = vmatpush1.bf16.xpose.msra.mxu0 0
        %891 = vmatprep.mubr.bf16.mxu0 0
        %892 = vmatmul.mubr.bf16.gmra.mrb[0].mxu0 %v854
        %v893 = vpop.f32.mrb[0].mxu0
        %v894 = vadd.f32 %v243, %v893
        %v895 = vpop.f32.mrb[0].mxu0
        %v896 = vpop.f32.mrb[0].mxu0
        %v897 = vadd.f32 %v244, %v896
        %v898 = vpop.f32.mrb[0].mxu0
        %899 = vdwg.mxu0
        %v901 = vsel %vm805, %v799, 0
        %v904 = vsel %vm805, %v803, 0
        %906 = vmatprep.subr.bf16.mxu0 0
        %907 = vmatpush1.bf16.xpose.msra.mxu0 %v904
        %908 = vmatprep.subr.bf16.mxu0 0
        %909 = vmatpush1.bf16.xpose.msra.mxu0 0
        %910 = vmatprep.subr.bf16.mxu0 0
        %911 = vmatpush1.bf16.xpose.msra.mxu0 0
        %912 = vmatprep.subr.bf16.mxu0 0
        %913 = vmatpush1.bf16.xpose.msra.mxu0 0
        %914 = vmatprep.subr.bf16.mxu0 0
        %915 = vmatpush1.bf16.xpose.msra.mxu0 0
        %916 = vmatprep.subr.bf16.mxu0 0
        %917 = vmatpush1.bf16.xpose.msra.mxu0 0
        %918 = vmatprep.subr.bf16.mxu0 0
        %919 = vmatpush1.bf16.xpose.msra.mxu0 0
        %920 = vmatprep.subr.bf16.mxu0 0
        %921 = vmatpush1.bf16.xpose.msra.mxu0 0
        %922 = vmatprep.subr.bf16.mxu0 0
        %923 = vmatpush1.bf16.xpose.msra.mxu0 0
        %924 = vmatprep.subr.bf16.mxu0 0
        %925 = vmatpush1.bf16.xpose.msra.mxu0 0
        %926 = vmatprep.subr.bf16.mxu0 0
        %927 = vmatpush1.bf16.xpose.msra.mxu0 0
        %928 = vmatprep.subr.bf16.mxu0 0
        %929 = vmatpush1.bf16.xpose.msra.mxu0 0
        %930 = vmatprep.subr.bf16.mxu0 0
        %931 = vmatpush1.bf16.xpose.msra.mxu0 0
        %932 = vmatprep.subr.bf16.mxu0 0
        %933 = vmatpush1.bf16.xpose.msra.mxu0 0
        %934 = vmatprep.subr.bf16.mxu0 0
        %935 = vmatpush1.bf16.xpose.msra.mxu0 0
        %936 = vmatprep.subr.bf16.mxu0 0
        %937 = vmatpush1.bf16.xpose.msra.mxu0 0
        %938 = vmatprep.mubr.bf16.mxu0 0
        %939 = vmatmul.mubr.bf16.gmra.mrb[0].mxu0 %v901
        %v940 = vpop.f32.mrb[0].mxu0
        %v941 = vadd.f32 %v243, %v940
        %v942 = vpop.f32.mrb[0].mxu0
        %v943 = vpop.f32.mrb[0].mxu0
        %v944 = vadd.f32 %v244, %v943
        %v945 = vpop.f32.mrb[0].mxu0
        %946 = vdwg.mxu0
        %v948 = vsel %vm805, %v800, 0
        %v951 = vsel %vm805, %v804, 0
        %953 = vmatprep.subr.bf16.mxu0 0
        %954 = vmatpush1.bf16.xpose.msra.mxu0 %v951
        %955 = vmatprep.subr.bf16.mxu0 0
        %956 = vmatpush1.bf16.xpose.msra.mxu0 0
        %957 = vmatprep.subr.bf16.mxu0 0
        %958 = vmatpush1.bf16.xpose.msra.mxu0 0
        %959 = vmatprep.subr.bf16.mxu0 0
        %960 = vmatpush1.bf16.xpose.msra.mxu0 0
        %961 = vmatprep.subr.bf16.mxu0 0
        %962 = vmatpush1.bf16.xpose.msra.mxu0 0
        %963 = vmatprep.subr.bf16.mxu0 0
        %964 = vmatpush1.bf16.xpose.msra.mxu0 0
        %965 = vmatprep.subr.bf16.mxu0 0
        %966 = vmatpush1.bf16.xpose.msra.mxu0 0
        %967 = vmatprep.subr.bf16.mxu0 0
        %968 = vmatpush1.bf16.xpose.msra.mxu0 0
        %969 = vmatprep.subr.bf16.mxu0 0
        %970 = vmatpush1.bf16.xpose.msra.mxu0 0
        %971 = vmatprep.subr.bf16.mxu0 0
        %972 = vmatpush1.bf16.xpose.msra.mxu0 0
        %973 = vmatprep.subr.bf16.mxu0 0
        %974 = vmatpush1.bf16.xpose.msra.mxu0 0
        %975 = vmatprep.subr.bf16.mxu0 0
        %976 = vmatpush1.bf16.xpose.msra.mxu0 0
        %977 = vmatprep.subr.bf16.mxu0 0
        %978 = vmatpush1.bf16.xpose.msra.mxu0 0
        %979 = vmatprep.subr.bf16.mxu0 0
        %980 = vmatpush1.bf16.xpose.msra.mxu0 0
        %981 = vmatprep.subr.bf16.mxu0 0
        %982 = vmatpush1.bf16.xpose.msra.mxu0 0
        %983 = vmatprep.subr.bf16.mxu0 0
        %984 = vmatpush1.bf16.xpose.msra.mxu0 0
        %985 = vmatprep.mubr.bf16.mxu0 0
        %986 = vmatmul.mubr.bf16.gmra.mrb[0].mxu0 %v948
        %v987 = vpop.f32.mrb[0].mxu0
        %v988 = vadd.f32 %v243, %v987
        %v989 = vpop.f32.mrb[0].mxu0
        %v990 = vpop.f32.mrb[0].mxu0
        %v991 = vadd.f32 %v244, %v990
        %v992 = vpop.f32.mrb[0].mxu0
        %993 = vdwg.mxu0
        %vm994 = vcmask 130048
        %v995 = vsel %vm994, %v847, -inf
        %996 = vmax.xlane.f32.xlu0 %v995
        %v997 = vpop.xlane.xlu0 %996
        %v998 = vsel %vm994, %v850, -inf
        %999 = vmax.xlane.f32.xlu0 %v998
        %v1000 = vpop.xlane.xlu0 %999
        %v1001 = vsel %vm994, %v894, -inf
        %1002 = vmax.xlane.f32.xlu0 %v1001
        %v1003 = vpop.xlane.xlu0 %1002
        %v1004 = vsel %vm994, %v897, -inf
        %1005 = vmax.xlane.f32.xlu0 %v1004
        %v1006 = vpop.xlane.xlu0 %1005
        %v1007 = vsel %vm994, %v941, -inf
        %1008 = vmax.xlane.f32.xlu0 %v1007
        %v1009 = vpop.xlane.xlu0 %1008
        %v1010 = vsel %vm994, %v944, -inf
        %1011 = vmax.xlane.f32.xlu0 %v1010
        %v1012 = vpop.xlane.xlu0 %1011
        %v1013 = vsel %vm994, %v988, -inf
        %1014 = vmax.xlane.f32.xlu0 %v1013
        %v1015 = vpop.xlane.xlu0 %1014
        %v1016 = vsel %vm994, %v991, -inf
        %1017 = vmax.xlane.f32.xlu0 %v1016
        %v1018 = vpop.xlane.xlu0 %1017
        %v1019 = vsub.f32 %v847, %v997
        %v1020 = vsub.f32 %v850, %v1000
        %v1021 = vsub.f32 %v894, %v1003
        %v1022 = vsub.f32 %v897, %v1006
        %v1023 = vsub.f32 %v941, %v1009
        %v1024 = vsub.f32 %v944, %v1012
        %v1025 = vsub.f32 %v988, %v1015
        %v1026 = vsub.f32 %v991, %v1018
        %v1027 = vmul.f32 %v1019, 1.442695
        %v1028 = vpow.pop %v1027
        %v1029 = vmul.f32 %v1020, 1.442695
        %v1030 = vpow.pop %v1029
        %v1031 = vmul.f32 %v1021, 1.442695
        %v1032 = vpow.pop %v1031
        %v1033 = vmul.f32 %v1022, 1.442695
        %v1034 = vpow.pop %v1033
        %v1035 = vmul.f32 %v1023, 1.442695
        %v1036 = vpow.pop %v1035
        %v1037 = vmul.f32 %v1024, 1.442695
        %v1038 = vpow.pop %v1037
        %v1039 = vmul.f32 %v1025, 1.442695
        %v1040 = vpow.pop %v1039
        %v1041 = vmul.f32 %v1026, 1.442695
        %v1042 = vpow.pop %v1041
        %v1043 = vsel %vm994, %v1028, 0.0
        %1044 = vadd.xlane.f32.xlu0 %v1043
        %v1045 = vpop.xlane.xlu0 %1044
        %v1046 = vsel %vm994, %v1030, 0.0
        %1047 = vadd.xlane.f32.xlu0 %v1046
        %v1048 = vpop.xlane.xlu0 %1047
        %v1049 = vsel %vm994, %v1032, 0.0
        %1050 = vadd.xlane.f32.xlu0 %v1049
        %v1051 = vpop.xlane.xlu0 %1050
        %v1052 = vsel %vm994, %v1034, 0.0
        %1053 = vadd.xlane.f32.xlu0 %v1052
        %v1054 = vpop.xlane.xlu0 %1053
        %v1055 = vsel %vm994, %v1036, 0.0
        %1056 = vadd.xlane.f32.xlu0 %v1055
        %v1057 = vpop.xlane.xlu0 %1056
        %v1058 = vsel %vm994, %v1038, 0.0
        %1059 = vadd.xlane.f32.xlu0 %v1058
        %v1060 = vpop.xlane.xlu0 %1059
        %v1061 = vsel %vm994, %v1040, 0.0
        %1062 = vadd.xlane.f32.xlu0 %v1061
        %v1063 = vpop.xlane.xlu0 %1062
        %v1064 = vsel %vm994, %v1042, 0.0
        %1065 = vadd.xlane.f32.xlu0 %v1064
        %v1066 = vpop.xlane.xlu0 %1065
        %v1067 = vrcp.pop %v1045
        %v1068 = vmul.f32 %v1028, %v1067
        %v1069 = vrcp.pop %v1048
        %v1070 = vmul.f32 %v1030, %v1069
        %v1071 = vrcp.pop %v1051
        %v1072 = vmul.f32 %v1032, %v1071
        %v1073 = vrcp.pop %v1054
        %v1074 = vmul.f32 %v1034, %v1073
        %v1075 = vrcp.pop %v1057
        %v1076 = vmul.f32 %v1036, %v1075
        %v1077 = vrcp.pop %v1060
        %v1078 = vmul.f32 %v1038, %v1077
        %v1079 = vrcp.pop %v1063
        %v1080 = vmul.f32 %v1040, %v1079
        %v1081 = vrcp.pop %v1066
        %v1082 = vmul.f32 %v1042, %v1081
        %v1083 = vpack.c.bf16 %v1070, %v1068
        %v1084 = vpack.c.bf16 %v1074, %v1072
        %v1085 = vpack.c.bf16 %v1078, %v1076
        %v1086 = vpack.c.bf16 %v1082, %v1080
        %v1088 = vsel %vm994, %v1083, 0
        %1090 = vmatprep.subr.bf16.mxu0 0
        %1091 = vmatpush1.bf16.msra.mxu0 %v797
        %1092 = vmatprep.subr.bf16.mxu0 0
        %1093 = vmatpush1.bf16.msra.mxu0 0
        %1094 = vmatprep.subr.bf16.mxu0 0
        %1095 = vmatpush1.bf16.msra.mxu0 0
        %1096 = vmatprep.subr.bf16.mxu0 0
        %1097 = vmatpush1.bf16.msra.mxu0 0
        %1098 = vmatprep.subr.bf16.mxu0 0
        %1099 = vmatpush1.bf16.msra.mxu0 0
        %1100 = vmatprep.subr.bf16.mxu0 0
        %1101 = vmatpush1.bf16.msra.mxu0 0
        %1102 = vmatprep.subr.bf16.mxu0 0
        %1103 = vmatpush1.bf16.msra.mxu0 0
        %1104 = vmatprep.subr.bf16.mxu0 0
        %1105 = vmatpush1.bf16.msra.mxu0 0
        %1106 = vmatprep.subr.bf16.mxu0 0
        %1107 = vmatpush1.bf16.msra.mxu0 0
        %1108 = vmatprep.subr.bf16.mxu0 0
        %1109 = vmatpush1.bf16.msra.mxu0 0
        %1110 = vmatprep.subr.bf16.mxu0 0
        %1111 = vmatpush1.bf16.msra.mxu0 0
        %1112 = vmatprep.subr.bf16.mxu0 0
        %1113 = vmatpush1.bf16.msra.mxu0 0
        %1114 = vmatprep.subr.bf16.mxu0 0
        %1115 = vmatpush1.bf16.msra.mxu0 0
        %1116 = vmatprep.subr.bf16.mxu0 0
        %1117 = vmatpush1.bf16.msra.mxu0 0
        %1118 = vmatprep.subr.bf16.mxu0 0
        %1119 = vmatpush1.bf16.msra.mxu0 0
        %1120 = vmatprep.subr.bf16.mxu0 0
        %1121 = vmatpush1.bf16.msra.mxu0 0
        %1122 = vmatprep.mubr.bf16.mxu0 0
        %1123 = vmatmul.mubr.bf16.gmra.mrb[0].mxu0 %v1088
        %v1124 = vpop.f32.mrb[0].mxu0
        %v1125 = vadd.f32 0.0, %v1124
        %v1126 = vpop.f32.mrb[0].mxu0
        %v1127 = vpop.f32.mrb[0].mxu0
        %v1128 = vadd.f32 0.0, %v1127
        %v1129 = vpop.f32.mrb[0].mxu0
        %1130 = vdwg.mxu0
        %v1132 = vsel %vm994, %v1084, 0
        %1134 = vmatprep.subr.bf16.mxu0 0
        %1135 = vmatpush1.bf16.msra.mxu0 %v798
        %1136 = vmatprep.subr.bf16.mxu0 0
        %1137 = vmatpush1.bf16.msra.mxu0 0
        %1138 = vmatprep.subr.bf16.mxu0 0
        %1139 = vmatpush1.bf16.msra.mxu0 0
        %1140 = vmatprep.subr.bf16.mxu0 0
        %1141 = vmatpush1.bf16.msra.mxu0 0
        %1142 = vmatprep.subr.bf16.mxu0 0
        %1143 = vmatpush1.bf16.msra.mxu0 0
        %1144 = vmatprep.subr.bf16.mxu0 0
        %1145 = vmatpush1.bf16.msra.mxu0 0
        %1146 = vmatprep.subr.bf16.mxu0 0
        %1147 = vmatpush1.bf16.msra.mxu0 0
        %1148 = vmatprep.subr.bf16.mxu0 0
        %1149 = vmatpush1.bf16.msra.mxu0 0
        %1150 = vmatprep.subr.bf16.mxu0 0
        %1151 = vmatpush1.bf16.msra.mxu0 0
        %1152 = vmatprep.subr.bf16.mxu0 0
        %1153 = vmatpush1.bf16.msra.mxu0 0
        %1154 = vmatprep.subr.bf16.mxu0 0
        %1155 = vmatpush1.bf16.msra.mxu0 0
        %1156 = vmatprep.subr.bf16.mxu0 0
        %1157 = vmatpush1.bf16.msra.mxu0 0
        %1158 = vmatprep.subr.bf16.mxu0 0
        %1159 = vmatpush1.bf16.msra.mxu0 0
        %1160 = vmatprep.subr.bf16.mxu0 0
        %1161 = vmatpush1.bf16.msra.mxu0 0
        %1162 = vmatprep.subr.bf16.mxu0 0
        %1163 = vmatpush1.bf16.msra.mxu0 0
        %1164 = vmatprep.subr.bf16.mxu0 0
        %1165 = vmatpush1.bf16.msra.mxu0 0
        %1166 = vmatprep.mubr.bf16.mxu0 0
        %1167 = vmatmul.mubr.bf16.gmra.mrb[0].mxu0 %v1132
        %v1168 = vpop.f32.mrb[0].mxu0
        %v1169 = vadd.f32 0.0, %v1168
        %v1170 = vpop.f32.mrb[0].mxu0
        %v1171 = vpop.f32.mrb[0].mxu0
        %v1172 = vadd.f32 0.0, %v1171
        %v1173 = vpop.f32.mrb[0].mxu0
        %1174 = vdwg.mxu0
        %v1176 = vsel %vm994, %v1085, 0
        %1178 = vmatprep.subr.bf16.mxu0 0
        %1179 = vmatpush1.bf16.msra.mxu0 %v799
        %1180 = vmatprep.subr.bf16.mxu0 0
        %1181 = vmatpush1.bf16.msra.mxu0 0
        %1182 = vmatprep.subr.bf16.mxu0 0
        %1183 = vmatpush1.bf16.msra.mxu0 0
        %1184 = vmatprep.subr.bf16.mxu0 0
        %1185 = vmatpush1.bf16.msra.mxu0 0
        %1186 = vmatprep.subr.bf16.mxu0 0
        %1187 = vmatpush1.bf16.msra.mxu0 0
        %1188 = vmatprep.subr.bf16.mxu0 0
        %1189 = vmatpush1.bf16.msra.mxu0 0
        %1190 = vmatprep.subr.bf16.mxu0 0
        %1191 = vmatpush1.bf16.msra.mxu0 0
        %1192 = vmatprep.subr.bf16.mxu0 0
        %1193 = vmatpush1.bf16.msra.mxu0 0
        %1194 = vmatprep.subr.bf16.mxu0 0
        %1195 = vmatpush1.bf16.msra.mxu0 0
        %1196 = vmatprep.subr.bf16.mxu0 0
        %1197 = vmatpush1.bf16.msra.mxu0 0
        %1198 = vmatprep.subr.bf16.mxu0 0
        %1199 = vmatpush1.bf16.msra.mxu0 0
        %1200 = vmatprep.subr.bf16.mxu0 0
        %1201 = vmatpush1.bf16.msra.mxu0 0
        %1202 = vmatprep.subr.bf16.mxu0 0
        %1203 = vmatpush1.bf16.msra.mxu0 0
        %1204 = vmatprep.subr.bf16.mxu0 0
        %1205 = vmatpush1.bf16.msra.mxu0 0
        %1206 = vmatprep.subr.bf16.mxu0 0
        %1207 = vmatpush1.bf16.msra.mxu0 0
        %1208 = vmatprep.subr.bf16.mxu0 0
        %1209 = vmatpush1.bf16.msra.mxu0 0
        %1210 = vmatprep.mubr.bf16.mxu0 0
        %1211 = vmatmul.mubr.bf16.gmra.mrb[0].mxu0 %v1176
        %v1212 = vpop.f32.mrb[0].mxu0
        %v1213 = vadd.f32 0.0, %v1212
        %v1214 = vpop.f32.mrb[0].mxu0
        %v1215 = vpop.f32.mrb[0].mxu0
        %v1216 = vadd.f32 0.0, %v1215
        %v1217 = vpop.f32.mrb[0].mxu0
        %1218 = vdwg.mxu0
        %v1220 = vsel %vm994, %v1086, 0
        %1222 = vmatprep.subr.bf16.mxu0 0
        %1223 = vmatpush1.bf16.msra.mxu0 %v800
        %1224 = vmatprep.subr.bf16.mxu0 0
        %1225 = vmatpush1.bf16.msra.mxu0 0
        %1226 = vmatprep.subr.bf16.mxu0 0
        %1227 = vmatpush1.bf16.msra.mxu0 0
        %1228 = vmatprep.subr.bf16.mxu0 0
        %1229 = vmatpush1.bf16.msra.mxu0 0
        %1230 = vmatprep.subr.bf16.mxu0 0
        %1231 = vmatpush1.bf16.msra.mxu0 0
        %1232 = vmatprep.subr.bf16.mxu0 0
        %1233 = vmatpush1.bf16.msra.mxu0 0
        %1234 = vmatprep.subr.bf16.mxu0 0
        %1235 = vmatpush1.bf16.msra.mxu0 0
        %1236 = vmatprep.subr.bf16.mxu0 0
        %1237 = vmatpush1.bf16.msra.mxu0 0
        %1238 = vmatprep.subr.bf16.mxu0 0
        %1239 = vmatpush1.bf16.msra.mxu0 0
        %1240 = vmatprep.subr.bf16.mxu0 0
        %1241 = vmatpush1.bf16.msra.mxu0 0
        %1242 = vmatprep.subr.bf16.mxu0 0
        %1243 = vmatpush1.bf16.msra.mxu0 0
        %1244 = vmatprep.subr.bf16.mxu0 0
        %1245 = vmatpush1.bf16.msra.mxu0 0
        %1246 = vmatprep.subr.bf16.mxu0 0
        %1247 = vmatpush1.bf16.msra.mxu0 0
        %1248 = vmatprep.subr.bf16.mxu0 0
        %1249 = vmatpush1.bf16.msra.mxu0 0
        %1250 = vmatprep.subr.bf16.mxu0 0
        %1251 = vmatpush1.bf16.msra.mxu0 0
        %1252 = vmatprep.subr.bf16.mxu0 0
        %1253 = vmatpush1.bf16.msra.mxu0 0
        %1254 = vmatprep.mubr.bf16.mxu0 0
        %1255 = vmatmul.mubr.bf16.gmra.mrb[0].mxu0 %v1220
        %v1256 = vpop.f32.mrb[0].mxu0
        %v1257 = vadd.f32 0.0, %v1256
        %v1258 = vpop.f32.mrb[0].mxu0
        %v1259 = vpop.f32.mrb[0].mxu0
        %v1260 = vadd.f32 0.0, %v1259
        %v1261 = vpop.f32.mrb[0].mxu0
        %1262 = vdwg.mxu0
        %v1263 = vpack.c.bf16 %v1128, %v1125
        %v1264 = vpack.c.bf16 %v1172, %v1169
        %v1265 = vpack.c.bf16 %v1216, %v1213
        %v1266 = vpack.c.bf16 %v1260, %v1257
        %v1268 = vsel %vm805, %v1263, 0
        %v1271 = vsel %vm805, %v423, 0
        %v1274 = vsel %vm805, %v424, 0
        %1276 = vmatprep.subr.bf16.mxu0 0
        %1277 = vmatpush1.bf16.xpose.msra.mxu0 %v1271
        %1278 = vmatprep.subr.bf16.mxu0 0
        %1279 = vmatpush1.bf16.xpose.msra.mxu0 %v1274
        %1280 = vmatprep.subr.bf16.mxu0 0
        %1281 = vmatpush1.bf16.xpose.msra.mxu0 0
        %1282 = vmatprep.subr.bf16.mxu0 0
        %1283 = vmatpush1.bf16.xpose.msra.mxu0 0
        %1284 = vmatprep.subr.bf16.mxu0 0
        %1285 = vmatpush1.bf16.xpose.msra.mxu0 0
        %1286 = vmatprep.subr.bf16.mxu0 0
        %1287 = vmatpush1.bf16.xpose.msra.mxu0 0
        %1288 = vmatprep.subr.bf16.mxu0 0
        %1289 = vmatpush1.bf16.xpose.msra.mxu0 0
        %1290 = vmatprep.subr.bf16.mxu0 0
        %1291 = vmatpush1.bf16.xpose.msra.mxu0 0
        %1292 = vmatprep.subr.bf16.mxu0 0
        %1293 = vmatpush1.bf16.xpose.msra.mxu0 0
        %1294 = vmatprep.subr.bf16.mxu0 0
        %1295 = vmatpush1.bf16.xpose.msra.mxu0 0
        %1296 = vmatprep.subr.bf16.mxu0 0
        %1297 = vmatpush1.bf16.xpose.msra.mxu0 0
        %1298 = vmatprep.subr.bf16.mxu0 0
        %1299 = vmatpush1.bf16.xpose.msra.mxu0 0
        %1300 = vmatprep.subr.bf16.mxu0 0
        %1301 = vmatpush1.bf16.xpose.msra.mxu0 0
        %1302 = vmatprep.subr.bf16.mxu0 0
        %1303 = vmatpush1.bf16.xpose.msra.mxu0 0
        %1304 = vmatprep.subr.bf16.mxu0 0
        %1305 = vmatpush1.bf16.xpose.msra.mxu0 0
        %1306 = vmatprep.subr.bf16.mxu0 0
        %1307 = vmatpush1.bf16.xpose.msra.mxu0 0
        %1308 = vmatprep.mubr.bf16.mxu0 0
        %1309 = vmatmul.mubr.bf16.gmra.mrb[0].mxu0 %v1268
        %v1310 = vpop.f32.mrb[0].mxu0
        %v1311 = vadd.f32 0.0, %v1310
        %v1312 = vpop.f32.mrb[0].mxu0
        %v1313 = vpop.f32.mrb[0].mxu0
        %v1314 = vadd.f32 0.0, %v1313
        %v1315 = vpop.f32.mrb[0].mxu0
        %1316 = vdwg.mxu0
        %v1318 = vsel %vm805, %v1264, 0
        %v1321 = vsel %vm805, %v479, 0
        %v1324 = vsel %vm805, %v480, 0
        %1326 = vmatprep.subr.bf16.mxu0 0
        %1327 = vmatpush1.bf16.xpose.msra.mxu0 %v1321
        %1328 = vmatprep.subr.bf16.mxu0 0
        %1329 = vmatpush1.bf16.xpose.msra.mxu0 %v1324
        %1330 = vmatprep.subr.bf16.mxu0 0
        %1331 = vmatpush1.bf16.xpose.msra.mxu0 0
        %1332 = vmatprep.subr.bf16.mxu0 0
        %1333 = vmatpush1.bf16.xpose.msra.mxu0 0
        %1334 = vmatprep.subr.bf16.mxu0 0
        %1335 = vmatpush1.bf16.xpose.msra.mxu0 0
        %1336 = vmatprep.subr.bf16.mxu0 0
        %1337 = vmatpush1.bf16.xpose.msra.mxu0 0
        %1338 = vmatprep.subr.bf16.mxu0 0
        %1339 = vmatpush1.bf16.xpose.msra.mxu0 0
        %1340 = vmatprep.subr.bf16.mxu0 0
        %1341 = vmatpush1.bf16.xpose.msra.mxu0 0
        %1342 = vmatprep.subr.bf16.mxu0 0
        %1343 = vmatpush1.bf16.xpose.msra.mxu0 0
        %1344 = vmatprep.subr.bf16.mxu0 0
        %1345 = vmatpush1.bf16.xpose.msra.mxu0 0
        %1346 = vmatprep.subr.bf16.mxu0 0
        %1347 = vmatpush1.bf16.xpose.msra.mxu0 0
        %1348 = vmatprep.subr.bf16.mxu0 0
        %1349 = vmatpush1.bf16.xpose.msra.mxu0 0
        %1350 = vmatprep.subr.bf16.mxu0 0
        %1351 = vmatpush1.bf16.xpose.msra.mxu0 0
        %1352 = vmatprep.subr.bf16.mxu0 0
        %1353 = vmatpush1.bf16.xpose.msra.mxu0 0
        %1354 = vmatprep.subr.bf16.mxu0 0
        %1355 = vmatpush1.bf16.xpose.msra.mxu0 0
        %1356 = vmatprep.subr.bf16.mxu0 0
        %1357 = vmatpush1.bf16.xpose.msra.mxu0 0
        %1358 = vmatprep.mubr.bf16.mxu0 0
        %1359 = vmatmul.mubr.bf16.gmra.mrb[0].mxu0 %v1318
        %v1360 = vpop.f32.mrb[0].mxu0
        %v1361 = vadd.f32 0.0, %v1360
        %v1362 = vpop.f32.mrb[0].mxu0
        %v1363 = vpop.f32.mrb[0].mxu0
        %v1364 = vadd.f32 0.0, %v1363
        %v1365 = vpop.f32.mrb[0].mxu0
        %1366 = vdwg.mxu0
        %v1368 = vsel %vm805, %v1265, 0
        %v1371 = vsel %vm805, %v532, 0
        %v1374 = vsel %vm805, %v533, 0
        %1376 = vmatprep.subr.bf16.mxu0 0
        %1377 = vmatpush1.bf16.xpose.msra.mxu0 %v1371
        %1378 = vmatprep.subr.bf16.mxu0 0
        %1379 = vmatpush1.bf16.xpose.msra.mxu0 %v1374
        %1380 = vmatprep.subr.bf16.mxu0 0
        %1381 = vmatpush1.bf16.xpose.msra.mxu0 0
        %1382 = vmatprep.subr.bf16.mxu0 0
        %1383 = vmatpush1.bf16.xpose.msra.mxu0 0
        %1384 = vmatprep.subr.bf16.mxu0 0
        %1385 = vmatpush1.bf16.xpose.msra.mxu0 0
        %1386 = vmatprep.subr.bf16.mxu0 0
        %1387 = vmatpush1.bf16.xpose.msra.mxu0 0
        %1388 = vmatprep.subr.bf16.mxu0 0
        %1389 = vmatpush1.bf16.xpose.msra.mxu0 0
        %1390 = vmatprep.subr.bf16.mxu0 0
        %1391 = vmatpush1.bf16.xpose.msra.mxu0 0
        %1392 = vmatprep.subr.bf16.mxu0 0
        %1393 = vmatpush1.bf16.xpose.msra.mxu0 0
        %1394 = vmatprep.subr.bf16.mxu0 0
        %1395 = vmatpush1.bf16.xpose.msra.mxu0 0
        %1396 = vmatprep.subr.bf16.mxu0 0
        %1397 = vmatpush1.bf16.xpose.msra.mxu0 0
        %1398 = vmatprep.subr.bf16.mxu0 0
        %1399 = vmatpush1.bf16.xpose.msra.mxu0 0
        %1400 = vmatprep.subr.bf16.mxu0 0
        %1401 = vmatpush1.bf16.xpose.msra.mxu0 0
        %1402 = vmatprep.subr.bf16.mxu0 0
        %1403 = vmatpush1.bf16.xpose.msra.mxu0 0
        %1404 = vmatprep.subr.bf16.mxu0 0
        %1405 = vmatpush1.bf16.xpose.msra.mxu0 0
        %1406 = vmatprep.subr.bf16.mxu0 0
        %1407 = vmatpush1.bf16.xpose.msra.mxu0 0
        %1408 = vmatprep.mubr.bf16.mxu0 0
        %1409 = vmatmul.mubr.bf16.gmra.mrb[0].mxu0 %v1368
        %v1410 = vpop.f32.mrb[0].mxu0
        %v1411 = vadd.f32 0.0, %v1410
        %v1412 = vpop.f32.mrb[0].mxu0
        %v1413 = vpop.f32.mrb[0].mxu0
        %v1414 = vadd.f32 0.0, %v1413
        %v1415 = vpop.f32.mrb[0].mxu0
        %1416 = vdwg.mxu0
        %v1418 = vsel %vm805, %v1266, 0
        %v1421 = vsel %vm805, %v585, 0
        %v1424 = vsel %vm805, %v586, 0
        %1426 = vmatprep.subr.bf16.mxu0 0
        %1427 = vmatpush1.bf16.xpose.msra.mxu0 %v1421
        %1428 = vmatprep.subr.bf16.mxu0 0
        %1429 = vmatpush1.bf16.xpose.msra.mxu0 %v1424
        %1430 = vmatprep.subr.bf16.mxu0 0
        %1431 = vmatpush1.bf16.xpose.msra.mxu0 0
        %1432 = vmatprep.subr.bf16.mxu0 0
        %1433 = vmatpush1.bf16.xpose.msra.mxu0 0
        %1434 = vmatprep.subr.bf16.mxu0 0
        %1435 = vmatpush1.bf16.xpose.msra.mxu0 0
        %1436 = vmatprep.subr.bf16.mxu0 0
        %1437 = vmatpush1.bf16.xpose.msra.mxu0 0
        %1438 = vmatprep.subr.bf16.mxu0 0
        %1439 = vmatpush1.bf16.xpose.msra.mxu0 0
        %1440 = vmatprep.subr.bf16.mxu0 0
        %1441 = vmatpush1.bf16.xpose.msra.mxu0 0
        %1442 = vmatprep.subr.bf16.mxu0 0
        %1443 = vmatpush1.bf16.xpose.msra.mxu0 0
        %1444 = vmatprep.subr.bf16.mxu0 0
        %1445 = vmatpush1.bf16.xpose.msra.mxu0 0
        %1446 = vmatprep.subr.bf16.mxu0 0
        %1447 = vmatpush1.bf16.xpose.msra.mxu0 0
        %1448 = vmatprep.subr.bf16.mxu0 0
        %1449 = vmatpush1.bf16.xpose.msra.mxu0 0
        %1450 = vmatprep.subr.bf16.mxu0 0
        %1451 = vmatpush1.bf16.xpose.msra.mxu0 0
        %1452 = vmatprep.subr.bf16.mxu0 0
        %1453 = vmatpush1.bf16.xpose.msra.mxu0 0
        %1454 = vmatprep.subr.bf16.mxu0 0
        %1455 = vmatpush1.bf16.xpose.msra.mxu0 0
        %1456 = vmatprep.subr.bf16.mxu0 0
        %1457 = vmatpush1.bf16.xpose.msra.mxu0 0
        %1458 = vmatprep.mubr.bf16.mxu0 0
        %1459 = vmatmul.mubr.bf16.gmra.mrb[0].mxu0 %v1418
        %v1460 = vpop.f32.mrb[0].mxu0
        %v1461 = vadd.f32 0.0, %v1460
        %v1462 = vpop.f32.mrb[0].mxu0
        %v1463 = vpop.f32.mrb[0].mxu0
        %v1464 = vadd.f32 0.0, %v1463
        %v1465 = vpop.f32.mrb[0].mxu0
        %1466 = vdwg.mxu0
        %v1467 = vadd.f32 %v1311, %v1361
        %v1468 = vadd.f32 %v1314, %v1364
        %v1469 = vadd.f32 %v1467, %v1411
        %v1470 = vadd.f32 %v1468, %v1414
        %v1471 = vadd.f32 %v1469, %v1461
        %v1472 = vadd.f32 %v1470, %v1464
        %v1473 = vpack.c.bf16 %v1472, %v1471
        %v1474 = vlaneseq
        %v1475 = vshrl.u32 %v1474, 7
        %v1476 = vsub.s32 0, %v1475
        %v1477 = vrot.slane %v271, %v1476
        %v1482 = vunpack.c.l.b16 %v253
        %v1483 = vunpack.c.l.b16 %v254
        %v1484 = vunpack.c.l.b16 %v255
        %v1485 = vunpack.c.l.b16 %v256
        %v1486 = vpack.c.b16 %v1483, %v1482
        %v1487 = vpack.c.b16 %v1485, %v1484
        %v1491 = vsel %vm311, %v1473, 0
        %1493 = vmatprep.subr.bf16.mxu0 0
        %1494 = vmatpush1.bf16.msra.mxu0 %v1486
        %1495 = vmatprep.subr.bf16.mxu0 0
        %1496 = vmatpush1.bf16.msra.mxu0 %v1487
        %1497 = vmatprep.subr.bf16.mxu0 0
        %1498 = vmatpush1.bf16.msra.mxu0 0
        %1499 = vmatprep.subr.bf16.mxu0 0
        %1500 = vmatpush1.bf16.msra.mxu0 0
        %1501 = vmatprep.subr.bf16.mxu0 0
        %1502 = vmatpush1.bf16.msra.mxu0 0
        %1503 = vmatprep.subr.bf16.mxu0 0
        %1504 = vmatpush1.bf16.msra.mxu0 0
        %1505 = vmatprep.subr.bf16.mxu0 0
        %1506 = vmatpush1.bf16.msra.mxu0 0
        %1507 = vmatprep.subr.bf16.mxu0 0
        %1508 = vmatpush1.bf16.msra.mxu0 0
        %1509 = vmatprep.subr.bf16.mxu0 0
        %1510 = vmatpush1.bf16.msra.mxu0 0
        %1511 = vmatprep.subr.bf16.mxu0 0
        %1512 = vmatpush1.bf16.msra.mxu0 0
        %1513 = vmatprep.subr.bf16.mxu0 0
        %1514 = vmatpush1.bf16.msra.mxu0 0
        %1515 = vmatprep.subr.bf16.mxu0 0
        %1516 = vmatpush1.bf16.msra.mxu0 0
        %1517 = vmatprep.subr.bf16.mxu0 0
        %1518 = vmatpush1.bf16.msra.mxu0 0
        %1519 = vmatprep.subr.bf16.mxu0 0
        %1520 = vmatpush1.bf16.msra.mxu0 0
        %1521 = vmatprep.subr.bf16.mxu0 0
        %1522 = vmatpush1.bf16.msra.mxu0 0
        %1523 = vmatprep.subr.bf16.mxu0 0
        %1524 = vmatpush1.bf16.msra.mxu0 0
        %1525 = vmatprep.mubr.bf16.mxu0 0
        %1526 = vmatmul.mubr.bf16.gmra.mrb[0].mxu0 %v1491
        %v1527 = vpop.f32.mrb[0].mxu0
        %v1528 = vadd.f32 %v1477, %v1527
        %v1529 = vpop.f32.mrb[0].mxu0
        %v1530 = vpop.f32.mrb[0].mxu0
        %v1531 = vadd.f32 %v1477, %v1530
        %v1532 = vpop.f32.mrb[0].mxu0
        %1533 = vdwg.mxu0
        %v1534 = vadd.f32 %v241, %v1528
        %v1535 = vadd.f32 %v242, %v1531
        %v1536 = vsel %vm311, %v1534, 0.0
        %1537 = vadd.xlane.f32.xlu0 %v1536
        %v1538 = vpop.xlane.xlu0 %1537
        %v1539 = vsel %vm311, %v1535, 0.0
        %1540 = vadd.xlane.f32.xlu0 %v1539
        %v1541 = vpop.xlane.xlu0 %1540
        %v1542 = vrcp.pop 32.0
        %v1543 = vmul.f32 %v1538, %v1542
        %v1544 = vmul.f32 %v1541, %v1542
        %v1545 = vsub.f32 %v1534, %v1543
        %v1546 = vsub.f32 %v1535, %v1544
        %v1547 = vmul.f32 %v1545, %v1545
        %v1548 = vmul.f32 %v1546, %v1546
        %v1549 = vsel %vm311, %v1547, 0.0
        %1550 = vadd.xlane.f32.xlu0 %v1549
        %v1551 = vpop.xlane.xlu0 %1550
        %v1552 = vsel %vm311, %v1548, 0.0
        %1553 = vadd.xlane.f32.xlu0 %v1552
        %v1554 = vpop.xlane.xlu0 %1553
        %v1555 = vmul.f32 %v1551, %v1542
        %v1556 = vmul.f32 %v1554, %v1542
        %v1557 = vadd.f32 %v1555, 1e-06
        %v1558 = vadd.f32 %v1556, 1e-06
        %v1559 = vrsqrt.pop %v1557
        %v1560 = vrsqrt.pop %v1558
        %v1561 = vmul.f32 %v1545, %v1559
        %v1562 = vmul.f32 %v1546, %v1560
        %v1563 = vlaneseq
        %v1564 = vshrl.u32 %v1563, 7
        %v1565 = vsub.s32 0, %v1564
        %v1566 = vrot.slane %v274, %v1565
        %v1567 = vmul.f32 %v1561, %v1566
        %v1568 = vmul.f32 %v1562, %v1566
        %v1569 = vlaneseq
        %v1570 = vshrl.u32 %v1569, 7
        %v1571 = vsub.s32 0, %v1570
        %v1572 = vrot.slane %v275, %v1571
        %v1573 = vadd.f32 %v1567, %v1572
        %v1574 = vadd.f32 %v1568, %v1572
        %v1575 = vpack.c.bf16 %v1574, %v1573
        %v1576 = vlaneseq
        %v1577 = vshrl.u32 %v1576, 7
        %v1578 = vsub.s32 0, %v1577
        %v1579 = vrot.slane %v272, %v1578
        %v1584 = vunpack.c.l.b16 %v257
        %v1585 = vunpack.c.l.b16 %v258
        %v1586 = vunpack.c.l.b16 %v259
        %v1587 = vunpack.c.l.b16 %v260
        %v1588 = vpack.c.b16 %v1585, %v1584
        %v1589 = vpack.c.b16 %v1587, %v1586
        %v1593 = vsel %vm311, %v1575, 0
        %1595 = vmatprep.subr.bf16.mxu0 0
        %1596 = vmatpush1.bf16.msra.mxu0 %v1588
        %1597 = vmatprep.subr.bf16.mxu0 0
        %1598 = vmatpush1.bf16.msra.mxu0 %v1589
        %1599 = vmatprep.subr.bf16.mxu0 0
        %1600 = vmatpush1.bf16.msra.mxu0 0
        %1601 = vmatprep.subr.bf16.mxu0 0
        %1602 = vmatpush1.bf16.msra.mxu0 0
        %1603 = vmatprep.subr.bf16.mxu0 0
        %1604 = vmatpush1.bf16.msra.mxu0 0
        %1605 = vmatprep.subr.bf16.mxu0 0
        %1606 = vmatpush1.bf16.msra.mxu0 0
        %1607 = vmatprep.subr.bf16.mxu0 0
        %1608 = vmatpush1.bf16.msra.mxu0 0
        %1609 = vmatprep.subr.bf16.mxu0 0
        %1610 = vmatpush1.bf16.msra.mxu0 0
        %1611 = vmatprep.subr.bf16.mxu0 0
        %1612 = vmatpush1.bf16.msra.mxu0 0
        %1613 = vmatprep.subr.bf16.mxu0 0
        %1614 = vmatpush1.bf16.msra.mxu0 0
        %1615 = vmatprep.subr.bf16.mxu0 0
        %1616 = vmatpush1.bf16.msra.mxu0 0
        %1617 = vmatprep.subr.bf16.mxu0 0
        %1618 = vmatpush1.bf16.msra.mxu0 0
        %1619 = vmatprep.subr.bf16.mxu0 0
        %1620 = vmatpush1.bf16.msra.mxu0 0
        %1621 = vmatprep.subr.bf16.mxu0 0
        %1622 = vmatpush1.bf16.msra.mxu0 0
        %1623 = vmatprep.subr.bf16.mxu0 0
        %1624 = vmatpush1.bf16.msra.mxu0 0
        %1625 = vmatprep.subr.bf16.mxu0 0
        %1626 = vmatpush1.bf16.msra.mxu0 0
        %1627 = vmatprep.mubr.bf16.mxu0 0
        %1628 = vmatmul.mubr.bf16.gmra.mrb[0].mxu0 %v1593
        %v1629 = vpop.f32.mrb[0].mxu0
        %v1630 = vadd.f32 %v1579, %v1629
        %v1631 = vpop.f32.mrb[0].mxu0
        %v1632 = vpop.f32.mrb[0].mxu0
        %v1633 = vadd.f32 %v1579, %v1632
        %v1634 = vpop.f32.mrb[0].mxu0
        %1635 = vdwg.mxu0
        %v1636 = vmax.f32 %v1630, 0.0
        %v1637 = vmax.f32 %v1633, 0.0
        %v1638 = vpack.c.bf16 %v1637, %v1636
        %v1639 = vlaneseq
        %v1640 = vshrl.u32 %v1639, 7
        %v1641 = vsub.s32 0, %v1640
        %v1642 = vrot.slane %v273, %v1641
        %v1651 = vunpack.c.l.b16 %v261
        %v1652 = vunpack.c.l.b16 %v262
        %v1653 = vunpack.c.l.b16 %v263
        %v1654 = vunpack.c.l.b16 %v264
        %v1655 = vunpack.c.l.b16 %v265
        %v1656 = vunpack.c.l.b16 %v266
        %v1657 = vunpack.c.l.b16 %v267
        %v1658 = vunpack.c.l.b16 %v268
        %v1659 = vpack.c.b16 %v1652, %v1651
        %v1660 = vpack.c.b16 %v1654, %v1653
        %v1661 = vpack.c.b16 %v1656, %v1655
        %v1662 = vpack.c.b16 %v1658, %v1657
        %vm1667 = vcmask 523264
        %v1669 = vsel %vm1667, %v1638, 0
        %1671 = vmatprep.subr.bf16.mxu0 0
        %1672 = vmatpush1.bf16.msra.mxu0 %v1659
        %1673 = vmatprep.subr.bf16.mxu0 0
        %1674 = vmatpush1.bf16.msra.mxu0 %v1660
        %1675 = vmatprep.subr.bf16.mxu0 0
        %1676 = vmatpush1.bf16.msra.mxu0 %v1661
        %1677 = vmatprep.subr.bf16.mxu0 0
        %1678 = vmatpush1.bf16.msra.mxu0 %v1662
        %1679 = vmatprep.subr.bf16.mxu0 0
        %1680 = vmatpush1.bf16.msra.mxu0 0
        %1681 = vmatprep.subr.bf16.mxu0 0
        %1682 = vmatpush1.bf16.msra.mxu0 0
        %1683 = vmatprep.subr.bf16.mxu0 0
        %1684 = vmatpush1.bf16.msra.mxu0 0
        %1685 = vmatprep.subr.bf16.mxu0 0
        %1686 = vmatpush1.bf16.msra.mxu0 0
        %1687 = vmatprep.subr.bf16.mxu0 0
        %1688 = vmatpush1.bf16.msra.mxu0 0
        %1689 = vmatprep.subr.bf16.mxu0 0
        %1690 = vmatpush1.bf16.msra.mxu0 0
        %1691 = vmatprep.subr.bf16.mxu0 0
        %1692 = vmatpush1.bf16.msra.mxu0 0
        %1693 = vmatprep.subr.bf16.mxu0 0
        %1694 = vmatpush1.bf16.msra.mxu0 0
        %1695 = vmatprep.subr.bf16.mxu0 0
        %1696 = vmatpush1.bf16.msra.mxu0 0
        %1697 = vmatprep.subr.bf16.mxu0 0
        %1698 = vmatpush1.bf16.msra.mxu0 0
        %1699 = vmatprep.subr.bf16.mxu0 0
        %1700 = vmatpush1.bf16.msra.mxu0 0
        %1701 = vmatprep.subr.bf16.mxu0 0
        %1702 = vmatpush1.bf16.msra.mxu0 0
        %1703 = vmatprep.mubr.bf16.mxu0 0
        %1704 = vmatmul.mubr.bf16.gmra.mrb[0].mxu0 %v1669
        %v1705 = vpop.f32.mrb[0].mxu0
        %v1706 = vadd.f32 %v1642, %v1705
        %v1707 = vpop.f32.mrb[0].mxu0
        %v1708 = vpop.f32.mrb[0].mxu0
        %v1709 = vadd.f32 %v1642, %v1708
        %v1710 = vpop.f32.mrb[0].mxu0
        %1711 = vdwg.mxu0
        %v1712 = vadd.f32 %v1573, %v1706
        %v1713 = vadd.f32 %v1574, %v1709
        %v1714 = vsel %vm311, %v1712, 0.0
        %1715 = vadd.xlane.f32.xlu0 %v1714
        %v1716 = vpop.xlane.xlu0 %1715
        %v1717 = vsel %vm311, %v1713, 0.0
        %1718 = vadd.xlane.f32.xlu0 %v1717
        %v1719 = vpop.xlane.xlu0 %1718
        %v1720 = vmul.f32 %v1716, %v1542
        %v1721 = vmul.f32 %v1719, %v1542
        %v1722 = vsub.f32 %v1712, %v1720
        %v1723 = vsub.f32 %v1713, %v1721
        %v1724 = vmul.f32 %v1722, %v1722
        %v1725 = vmul.f32 %v1723, %v1723
        %v1726 = vsel %vm311, %v1724, 0.0
        %1727 = vadd.xlane.f32.xlu0 %v1726
        %v1728 = vpop.xlane.xlu0 %1727
        %v1729 = vsel %vm311, %v1725, 0.0
        %1730 = vadd.xlane.f32.xlu0 %v1729
        %v1731 = vpop.xlane.xlu0 %1730
        %v1732 = vmul.f32 %v1728, %v1542
        %v1733 = vmul.f32 %v1731, %v1542
        %v1734 = vadd.f32 %v1732, 1e-06
        %v1735 = vadd.f32 %v1733, 1e-06
        %v1736 = vrsqrt.pop %v1734
        %v1737 = vrsqrt.pop %v1735
        %v1738 = vmul.f32 %v1722, %v1736
        %v1739 = vmul.f32 %v1723, %v1737
        %v1740 = vlaneseq
        %v1741 = vshrl.u32 %v1740, 7
        %v1742 = vsub.s32 0, %v1741
        %v1743 = vrot.slane %v276, %v1742
        %v1744 = vmul.f32 %v1738, %v1743
        %v1745 = vmul.f32 %v1739, %v1743
        %v1746 = vlaneseq
        %v1747 = vshrl.u32 %v1746, 7
        %v1748 = vsub.s32 0, %v1747
        %v1749 = vrot.slane %v277, %v1748
        %v1750 = vadd.f32 %v1744, %v1749
        %v1751 = vadd.f32 %v1745, %v1749
        %1752 = vst.msk [vmem:[#allocation2] sm:$0xff] %vm311, %v1750
        %1753 = vst.msk [vmem:[#allocation2 + $0x8] sm:$0xff] %vm311, %v1751
        // Predicated region
        $region45: #{tpu_custom_call.1} parent=39 // pred_check
          %p1754 = pneg %p145
        $region46: #{tpu_custom_call.1} parent=39 // pred_check_branch
          %1756 = sbr.rel (%p1754) target = $region48
        $region47: #{tpu_custom_call.1} parent=39 // pred_region
          %s1758 = ssub.s32 256, 256
          %1759 = vsyncadd [#allocation3], %s1758
          %s1760 = sshll.u32 [#allocation2], 4
          %s1761 = int_to_ptr.vmem [resolvable:$true] %s1760
          %1766 = dma.vmem_to_hbm [thread:$0]  %s1761, 256, %s5, [#allocation3], 128, 128, 8
        $region48: #{tpu_custom_call.1} parent=39 // pred_fallthru
          _
        // Predicated region
        $region49: #{tpu_custom_call.1} parent=39 // pred_check
          %p1767 = pneg %p145
        $region50: #{tpu_custom_call.1} parent=39 // pred_check_branch
          %1769 = sbr.rel (%p1767) target = $region52
        $region51: #{tpu_custom_call.1} parent=39 // pred_region
          %1770 = dma.done [#allocation3], 256
        $region52: #{tpu_custom_call.1} parent=39 // pred_fallthru
          _
      $region40: #{tpu_custom_call.1} parent=5 // pred_fallthru
        _
      %p1771 = scmp.le.s32.totalorder 2, %s12
      // Predicated region
      $region53: #{tpu_custom_call.1} parent=5 // pred_check
        %p1772 = pneg %p1771
      $region54: #{tpu_custom_call.1} parent=5 // pred_check_branch
        %1774 = sbr.rel (%p1772) target = $region56
      $region55: #{tpu_custom_call.1} parent=5 // pred_region
        %s1775 = ssub.s32 %s12, 2
      $region56: #{tpu_custom_call.1} parent=5 // pred_fallthru
        _
    $region6: #{tpu_custom_call.1} parent=1 // loop_footer
      %s16 = sadd.s32 1, %s12
    $region7: #{tpu_custom_call.1} parent=1 // loop_footer_branch
      %11 = sbr.rel target = $region3
    $region8: #{tpu_custom_call.1} parent=1 // loop_exit
      _
    %1776 = vsyncpa [#allocation3], 1
    %s1777 = scalar_lea.sflag [#allocation3], 1
    %1778 = vsyncpa %s1777, 1

</llo_original>
